<compile_context>
chip_gen: v7x
topology: tpu7x:2x2x1
jax: 0.10.0
libtpu: 0.0.40
codegen_flags: <defaults>
</compile_context>

<pallas_src>
import functools
import math

import jax
import jax.numpy as jnp
from jax.experimental import pallas as pl
from jax.experimental.pallas import tpu as pltpu


# ----------------------------------------------------------------------------
# Fused DecoderLayer kernel (single grid step, whole batch)
# ----------------------------------------------------------------------------

def _decoder_layer_kernel(x_ref,                      # (B*Tq + B*Tk, E) = [tgt ; mem]
                          qkv_w_ref, qkv_b_ref,       # (E, 3E), (1, 3E)   (scale folded into Q)
                          out_w_ref, out_b_ref,       # (E, E),  (1, E)
                          w1_ref, b1_ref,             # (E, F),  (1, F)
                          w2_ref, b2_ref,             # (F, E),  (1, E)
                          g1_ref, be1_ref,            # (1, E) LayerNorm1
                          g2_ref, be2_ref,            # (1, E) LayerNorm2
                          o_ref,                      # (B*Tq, E)
                          *, B, Tq, Tk, num_heads, eps):
    E = qkv_w_ref.shape[0]
    hd = E // num_heads
    n_tgt = B * Tq

    x = x_ref[...]                                    # (B*Tq + B*Tk, E)

    # Fused Q/K/V projection: ONE MXU push over the stacked [tgt; mem] rows.
    # (Softmax scale is already folded into the Q columns / Q bias.)
    qkv = (jnp.dot(x, qkv_w_ref[...], preferred_element_type=jnp.float32)
           + qkv_b_ref[...])                          # (R, 3E)
    q = qkv[:n_tgt, :E]                               # tgt rows, Q lanes
    k = qkv[n_tgt:, E:2 * E]                          # mem rows, K lanes
    v = qkv[n_tgt:, 2 * E:]                           # mem rows, V lanes

    # Per-batch, per-head attention (tiny 8x8 scores); head outputs are written
    # into their lane slice via concat so the output projection is ONE matmul.
    per_batch = []
    for b in range(B):                                # static: B is tiny
        qb = q[b * Tq:(b + 1) * Tq, :]                # (Tq, E)
        kb = k[b * Tk:(b + 1) * Tk, :]                # (Tk, E)
        vb = v[b * Tk:(b + 1) * Tk, :]                # (Tk, E)
        per_head = []
        for h in range(num_heads):                    # static: nhead is tiny
            sl = slice(h * hd, (h + 1) * hd)
            s = jnp.dot(qb[:, sl], kb[:, sl].T,
                        preferred_element_type=jnp.float32)      # (Tq, Tk)
            s = s - jnp.max(s, axis=-1, keepdims=True)
            p = jnp.exp(s)
            p = p * pl.reciprocal(jnp.sum(p, axis=-1, keepdims=True), approx=True)
            per_head.append(jnp.dot(p, vb[:, sl],
                                    preferred_element_type=jnp.float32))  # (Tq, hd)
        per_batch.append(jnp.concatenate(per_head, axis=1))      # (Tq, E)
    attn = jnp.concatenate(per_batch, axis=0)                    # (B*Tq, E)

    # Output projection hoisted out of the head loop: single (B*Tq,E)x(E,E).
    attn = (jnp.dot(attn, out_w_ref[...], preferred_element_type=jnp.float32)
            + out_b_ref[...])

    # Residual + LayerNorm 1 (dropout1 is identity in eval mode).
    tgt = x[:n_tgt, :]
    x1 = tgt + attn
    mu = jnp.mean(x1, axis=-1, keepdims=True)
    var = jnp.mean((x1 - mu) ** 2, axis=-1, keepdims=True)
    x1 = (x1 - mu) * jax.lax.rsqrt(var + eps) * g1_ref[...] + be1_ref[...]

    # Feed-forward: linear1 -> relu -> linear2 (dropout identity in eval mode).
    ff = jnp.dot(x1, w1_ref[...], preferred_element_type=jnp.float32) + b1_ref[...]
    ff = jnp.maximum(ff, 0.0)
    ff = jnp.dot(ff, w2_ref[...], preferred_element_type=jnp.float32) + b2_ref[...]

    # Residual + LayerNorm 2 (dropout2 identity in eval mode).
    y = x1 + ff
    mu = jnp.mean(y, axis=-1, keepdims=True)
    var = jnp.mean((y - mu) ** 2, axis=-1, keepdims=True)
    o_ref[...] = (y - mu) * jax.lax.rsqrt(var + eps) * g2_ref[...] + be2_ref[...]


def decoder_layer(tgt, memory, params, *, num_heads=2, eps=1e-5):
    """DecoderLayer.forward(tgt, memory) in eval mode. tgt: (B,Tq,E), memory: (B,Tk,E)."""
    B, Tq, E = tgt.shape
    Tk = memory.shape[1]
    F = params["linear1_w"].shape[0]
    hd = E // num_heads
    scale = 1.0 / math.sqrt(hd)

    # Host-side (trace-time) layout prep: transpose PyTorch (out,in) weights so
    # every in-kernel matmul is plain row-major, fold the softmax scale into Wq
    # and its bias, and stack all QKV weights into one lane-contiguous (E,3E).
    in_w, in_b = params["in_proj_w"], params["in_proj_b"]        # (3E,E), (3E,)
    qkv_wT = jnp.concatenate([in_w[:E].T * scale, in_w[E:].T], axis=1)      # (E, 3E)
    qkv_b = jnp.concatenate([in_b[:E] * scale, in_b[E:]]).reshape(1, 3 * E)
    out_wT = params["out_proj_w"].T                              # (E, E)
    out_b = params["out_proj_b"].reshape(1, E)
    w1T = params["linear1_w"].T                                  # (E, F)
    b1 = params["linear1_b"].reshape(1, F)
    w2T = params["linear2_w"].T                                  # (F, E)
    b2 = params["linear2_b"].reshape(1, E)
    g1 = params["norm1_g"].reshape(1, E)
    be1 = params["norm1_b"].reshape(1, E)
    g2 = params["norm2_g"].reshape(1, E)
    be2 = params["norm2_b"].reshape(1, E)

    # Single lane/sublane-dense slab: [flattened tgt rows ; flattened memory rows].
    stacked = jnp.concatenate(
        [tgt.reshape(B * Tq, E), memory.reshape(B * Tk, E)], axis=0)

    def fullspec(arr):
        nd = arr.ndim
        return pl.BlockSpec(arr.shape, lambda i, _nd=nd: (0,) * _nd)

    kernel = functools.partial(_decoder_layer_kernel, B=B, Tq=Tq, Tk=Tk,
                               num_heads=num_heads, eps=eps)
    operands = (stacked, qkv_wT, qkv_b, out_wT, out_b,
                w1T, b1, w2T, b2, g1, be1, g2, be2)
    out2d = pl.pallas_call(
        kernel,
        grid=(1,),                                   # whole batch in one step
        in_specs=[fullspec(a) for a in operands],
        out_specs=pl.BlockSpec((B * Tq, E), lambda i: (0, 0)),
        out_shape=jax.ShapeDtypeStruct((B * Tq, E), jnp.float32),
        compiler_params=pltpu.CompilerParams(dimension_semantics=("arbitrary",)),
    )(*operands)
    return out2d.reshape(B, Tq, E)


# ----------------------------------------------------------------------------
# Pure-JAX reference (mirrors nn.MultiheadAttention / nn.LayerNorm in eval mode)
# ----------------------------------------------------------------------------

def decoder_layer_ref(tgt, memory, params, *, num_heads=2, eps=1e-5):
    hp = jax.lax.Precision.HIGHEST
    B, Tq, E = tgt.shape
    Tk = memory.shape[1]
    hd = E // num_heads
    in_w, in_b = params["in_proj_w"], params["in_proj_b"]

    q = jnp.einsum("bte,fe->btf", tgt, in_w[:E], precision=hp) + in_b[:E]
    k = jnp.einsum("bte,fe->btf", memory, in_w[E:2 * E], precision=hp) + in_b[E:2 * E]
    v = jnp.einsum("bte,fe->btf", memory, in_w[2 * E:], precision=hp) + in_b[2 * E:]
    q = q.reshape(B, Tq, num_heads, hd).transpose(0, 2, 1, 3)
    k = k.reshape(B, Tk, num_heads, hd).transpose(0, 2, 1, 3)
    v = v.reshape(B, Tk, num_heads, hd).transpose(0, 2, 1, 3)
    s = jnp.einsum("bhqd,bhkd->bhqk", q, k, precision=hp) / math.sqrt(hd)
    p = jax.nn.softmax(s, axis=-1)
    o = jnp.einsum("bhqk,bhkd->bhqd", p, v, precision=hp)
    o = o.transpose(0, 2, 1, 3).reshape(B, Tq, E)
    attn = jnp.einsum("bte,fe->btf", o, params["out_proj_w"], precision=hp) + params["out_proj_b"]

    def ln(x, g, b):
        mu = jnp.mean(x, -1, keepdims=True)
        var = jnp.mean((x - mu) ** 2, -1, keepdims=True)
        return (x - mu) / jnp.sqrt(var + eps) * g + b

    x = ln(tgt + attn, params["norm1_g"], params["norm1_b"])
    ff = jax.nn.relu(jnp.einsum("bte,fe->btf", x, params["linear1_w"], precision=hp)
                     + params["linear1_b"])
    ff = jnp.einsum("btf,ef->bte", ff, params["linear2_w"], precision=hp) + params["linear2_b"]
    return ln(x + ff, params["norm2_g"], params["norm2_b"])


# ----------------------------------------------------------------------------
# Deterministic parameter init (PyTorch layouts: Linear weight is (out, in))
# ----------------------------------------------------------------------------

def init_params(key, d_model=32, dim_feedforward=64):
    ks = jax.random.split(key, 8)
    r = lambda k, shape, s=0.05: s * jax.random.normal(k, shape, dtype=jnp.float32)
    return {
        "in_proj_w": r(ks[0], (3 * d_model, d_model)),
        "in_proj_b": r(ks[1], (3 * d_model,)),
        "out_proj_w": r(ks[2], (d_model, d_model)),
        "out_proj_b": r(ks[3], (d_model,)),
        "linear1_w": r(ks[4], (dim_feedforward, d_model)),
        "linear1_b": r(ks[5], (dim_feedforward,)),
        "linear2_w": r(ks[6], (d_model, dim_feedforward)),
        "linear2_b": r(ks[7], (d_model,)),
        "norm1_g": jnp.ones((d_model,), jnp.float32),
        "norm1_b": jnp.zeros((d_model,), jnp.float32),
        "norm2_g": jnp.ones((d_model,), jnp.float32),
        "norm2_b": jnp.zeros((d_model,), jnp.float32),
    }


# ----------------------------------------------------------------------------
# Main
# ----------------------------------------------------------------------------

if __name__ == "__main__":
    B, Tq, Tk = 2, 8, 8
    d_model, nhead, dff = 32, 2, 64

    key = jax.random.PRNGKey(0)
    k1, k2, k3 = jax.random.split(key, 3)
    tgt = jax.random.normal(k1, (B, Tq, d_model), dtype=jnp.float32)
    memory = jax.random.normal(k2, (B, Tk, d_model), dtype=jnp.float32)
    params = init_params(k3, d_model, dff)

    out = decoder_layer(tgt, memory, params, num_heads=nhead)
    out = jax.block_until_ready(out)

    ref = jax.block_until_ready(decoder_layer_ref(tgt, memory, params, num_heads=nhead))

    assert out.shape == (B, Tq, d_model)
    assert bool(jnp.all(jnp.isfinite(out)))
    assert float(jnp.max(jnp.abs(out - ref))) < 5e-2
    print("KERNEL_OK")
</pallas_src>

<mosaic_0001>
module attributes {stable_mosaic.version = 11 : i64} {
  func.func @_decoder_layer_kernel(%arg0: i32, %arg1: memref<32x32xf32, #tpu.memory_space<vmem>>, %arg2: memref<32x96xf32, #tpu.memory_space<vmem>>, %arg3: memref<1x96xf32, #tpu.memory_space<vmem>>, %arg4: memref<32x32xf32, #tpu.memory_space<vmem>>, %arg5: memref<1x32xf32, #tpu.memory_space<vmem>>, %arg6: memref<32x64xf32, #tpu.memory_space<vmem>>, %arg7: memref<1x64xf32, #tpu.memory_space<vmem>>, %arg8: memref<64x32xf32, #tpu.memory_space<vmem>>, %arg9: memref<1x32xf32, #tpu.memory_space<vmem>>, %arg10: memref<1x32xf32, #tpu.memory_space<vmem>>, %arg11: memref<1x32xf32, #tpu.memory_space<vmem>>, %arg12: memref<1x32xf32, #tpu.memory_space<vmem>>, %arg13: memref<1x32xf32, #tpu.memory_space<vmem>>, %arg14: memref<16x32xf32, #tpu.memory_space<vmem>>) attributes {dimension_semantics = [#tpu.dimension_semantics<arbitrary>], iteration_bounds = array<i64: 1>, scalar_prefetch = 0 : i64, scratch_operands = 0 : i64, tpu.core_type = #tpu.core_type<tc>, window_params = [{pipeline_mode = #tpu.pipeline_mode<synchronous>, transform_indices = @transform_0, window_bounds = array<i64: 32, 32>}, {pipeline_mode = #tpu.pipeline_mode<synchronous>, transform_indices = @transform_1, window_bounds = array<i64: 32, 96>}, {pipeline_mode = #tpu.pipeline_mode<synchronous>, transform_indices = @transform_2, window_bounds = array<i64: 1, 96>}, {pipeline_mode = #tpu.pipeline_mode<synchronous>, transform_indices = @transform_3, window_bounds = array<i64: 32, 32>}, {pipeline_mode = #tpu.pipeline_mode<synchronous>, transform_indices = @transform_4, window_bounds = array<i64: 1, 32>}, {pipeline_mode = #tpu.pipeline_mode<synchronous>, transform_indices = @transform_5, window_bounds = array<i64: 32, 64>}, {pipeline_mode = #tpu.pipeline_mode<synchronous>, transform_indices = @transform_6, window_bounds = array<i64: 1, 64>}, {pipeline_mode = #tpu.pipeline_mode<synchronous>, transform_indices = @transform_7, window_bounds = array<i64: 64, 32>}, {pipeline_mode = #tpu.pipeline_mode<synchronous>, transform_indices = @transform_8, window_bounds = array<i64: 1, 32>}, {pipeline_mode = #tpu.pipeline_mode<synchronous>, transform_indices = @transform_9, window_bounds = array<i64: 1, 32>}, {pipeline_mode = #tpu.pipeline_mode<synchronous>, transform_indices = @transform_10, window_bounds = array<i64: 1, 32>}, {pipeline_mode = #tpu.pipeline_mode<synchronous>, transform_indices = @transform_11, window_bounds = array<i64: 1, 32>}, {pipeline_mode = #tpu.pipeline_mode<synchronous>, transform_indices = @transform_12, window_bounds = array<i64: 1, 32>}, {pipeline_mode = #tpu.pipeline_mode<synchronous>, transform_indices = @transform_13, window_bounds = array<i64: 16, 32>}]} {
    %c0 = arith.constant 0 : index
    %c0_0 = arith.constant 0 : index
    %0 = vector.load %arg1[%c0, %c0_0] : memref<32x32xf32, #tpu.memory_space<vmem>>, vector<32x32xf32>
    %c0_1 = arith.constant 0 : index
    %c0_2 = arith.constant 0 : index
    %1 = vector.load %arg2[%c0_1, %c0_2] : memref<32x96xf32, #tpu.memory_space<vmem>>, vector<32x96xf32>
    %cst = arith.constant dense<0.000000e+00> : vector<32x96xf32>
    %2 = tpu.matmul %0, %1, %cst {dimension_numbers = #tpu.dot_dimension_numbers<[1], [0], [0], [1], [0, 0, 1, 1], [], []>} : vector<32x32xf32>, vector<32x96xf32>, vector<32x96xf32> -> vector<32x96xf32>
    %c0_3 = arith.constant 0 : index
    %c0_4 = arith.constant 0 : index
    %3 = vector.load %arg3[%c0_3, %c0_4] : memref<1x96xf32, #tpu.memory_space<vmem>>, vector<1x96xf32>
    %4 = vector.broadcast %3 : vector<1x96xf32> to vector<32x96xf32>
    %5 = arith.addf %2, %4 : vector<32x96xf32>
    %6 = vector.extract_strided_slice %5 {offsets = [0, 0], sizes = [16, 32], strides = [1, 1]} : vector<32x96xf32> to vector<16x32xf32>
    %7 = vector.extract_strided_slice %5 {offsets = [16, 32], sizes = [16, 32], strides = [1, 1]} : vector<32x96xf32> to vector<16x32xf32>
    %8 = vector.extract_strided_slice %5 {offsets = [16, 64], sizes = [16, 32], strides = [1, 1]} : vector<32x96xf32> to vector<16x32xf32>
    %9 = vector.extract_strided_slice %6 {offsets = [0, 0], sizes = [8, 32], strides = [1, 1]} : vector<16x32xf32> to vector<8x32xf32>
    %10 = vector.extract_strided_slice %7 {offsets = [0, 0], sizes = [8, 32], strides = [1, 1]} : vector<16x32xf32> to vector<8x32xf32>
    %11 = vector.extract_strided_slice %8 {offsets = [0, 0], sizes = [8, 32], strides = [1, 1]} : vector<16x32xf32> to vector<8x32xf32>
    %12 = vector.extract_strided_slice %9 {offsets = [0, 0], sizes = [8, 16], strides = [1, 1]} : vector<8x32xf32> to vector<8x16xf32>
    %13 = vector.extract_strided_slice %10 {offsets = [0, 0], sizes = [8, 16], strides = [1, 1]} : vector<8x32xf32> to vector<8x16xf32>
    %14 = tpu.transpose %13, [1, 0] : vector<8x16xf32> -> vector<16x8xf32>
    %cst_5 = arith.constant dense<0.000000e+00> : vector<8x8xf32>
    %15 = tpu.matmul %12, %14, %cst_5 {dimension_numbers = #tpu.dot_dimension_numbers<[1], [0], [0], [1], [0, 0, 1, 1], [], []>} : vector<8x16xf32>, vector<16x8xf32>, vector<8x8xf32> -> vector<8x8xf32>
    %cst_6 = arith.constant dense<0xFF800000> : vector<8xf32>
    %16 = vector.multi_reduction <maximumf>, %15, %cst_6 [1] : vector<8x8xf32> to vector<8xf32>
    %17 = vector.shape_cast %16 : vector<8xf32> to vector<8x1xf32>
    %18 = vector.broadcast %17 : vector<8x1xf32> to vector<8x8xf32>
    %19 = arith.subf %15, %18 : vector<8x8xf32>
    %20 = math.exp %19 : vector<8x8xf32>
    %cst_7 = arith.constant dense<0.000000e+00> : vector<8xf32>
    %21 = vector.multi_reduction <add>, %20, %cst_7 [1] : vector<8x8xf32> to vector<8xf32>
    %22 = vector.shape_cast %21 : vector<8xf32> to vector<8x1xf32>
    %23 = tpu.reciprocal %22 {approx = true} : vector<8x1xf32> -> vector<8x1xf32>
    %24 = vector.broadcast %23 : vector<8x1xf32> to vector<8x8xf32>
    %25 = arith.mulf %20, %24 : vector<8x8xf32>
    %26 = vector.extract_strided_slice %11 {offsets = [0, 0], sizes = [8, 16], strides = [1, 1]} : vector<8x32xf32> to vector<8x16xf32>
    %cst_8 = arith.constant dense<0.000000e+00> : vector<8x16xf32>
    %27 = tpu.matmul %25, %26, %cst_8 {dimension_numbers = #tpu.dot_dimension_numbers<[1], [0], [0], [1], [0, 0, 1, 1], [], []>} : vector<8x8xf32>, vector<8x16xf32>, vector<8x16xf32> -> vector<8x16xf32>
    %28 = vector.extract_strided_slice %9 {offsets = [0, 16], sizes = [8, 16], strides = [1, 1]} : vector<8x32xf32> to vector<8x16xf32>
    %29 = vector.extract_strided_slice %10 {offsets = [0, 16], sizes = [8, 16], strides = [1, 1]} : vector<8x32xf32> to vector<8x16xf32>
    %30 = tpu.transpose %29, [1, 0] : vector<8x16xf32> -> vector<16x8xf32>
    %cst_9 = arith.constant dense<0.000000e+00> : vector<8x8xf32>
    %31 = tpu.matmul %28, %30, %cst_9 {dimension_numbers = #tpu.dot_dimension_numbers<[1], [0], [0], [1], [0, 0, 1, 1], [], []>} : vector<8x16xf32>, vector<16x8xf32>, vector<8x8xf32> -> vector<8x8xf32>
    %cst_10 = arith.constant dense<0xFF800000> : vector<8xf32>
    %32 = vector.multi_reduction <maximumf>, %31, %cst_10 [1] : vector<8x8xf32> to vector<8xf32>
    %33 = vector.shape_cast %32 : vector<8xf32> to vector<8x1xf32>
    %34 = vector.broadcast %33 : vector<8x1xf32> to vector<8x8xf32>
    %35 = arith.subf %31, %34 : vector<8x8xf32>
    %36 = math.exp %35 : vector<8x8xf32>
    %cst_11 = arith.constant dense<0.000000e+00> : vector<8xf32>
    %37 = vector.multi_reduction <add>, %36, %cst_11 [1] : vector<8x8xf32> to vector<8xf32>
    %38 = vector.shape_cast %37 : vector<8xf32> to vector<8x1xf32>
    %39 = tpu.reciprocal %38 {approx = true} : vector<8x1xf32> -> vector<8x1xf32>
    %40 = vector.broadcast %39 : vector<8x1xf32> to vector<8x8xf32>
    %41 = arith.mulf %36, %40 : vector<8x8xf32>
    %42 = vector.extract_strided_slice %11 {offsets = [0, 16], sizes = [8, 16], strides = [1, 1]} : vector<8x32xf32> to vector<8x16xf32>
    %cst_12 = arith.constant dense<0.000000e+00> : vector<8x16xf32>
    %43 = tpu.matmul %41, %42, %cst_12 {dimension_numbers = #tpu.dot_dimension_numbers<[1], [0], [0], [1], [0, 0, 1, 1], [], []>} : vector<8x8xf32>, vector<8x16xf32>, vector<8x16xf32> -> vector<8x16xf32>
    %44 = tpu.concatenate %27, %43 in 1 : vector<8x16xf32>, vector<8x16xf32> -> vector<8x32xf32>
    %45 = vector.extract_strided_slice %6 {offsets = [8, 0], sizes = [8, 32], strides = [1, 1]} : vector<16x32xf32> to vector<8x32xf32>
    %46 = vector.extract_strided_slice %7 {offsets = [8, 0], sizes = [8, 32], strides = [1, 1]} : vector<16x32xf32> to vector<8x32xf32>
    %47 = vector.extract_strided_slice %8 {offsets = [8, 0], sizes = [8, 32], strides = [1, 1]} : vector<16x32xf32> to vector<8x32xf32>
    %48 = vector.extract_strided_slice %45 {offsets = [0, 0], sizes = [8, 16], strides = [1, 1]} : vector<8x32xf32> to vector<8x16xf32>
    %49 = vector.extract_strided_slice %46 {offsets = [0, 0], sizes = [8, 16], strides = [1, 1]} : vector<8x32xf32> to vector<8x16xf32>
    %50 = tpu.transpose %49, [1, 0] : vector<8x16xf32> -> vector<16x8xf32>
    %cst_13 = arith.constant dense<0.000000e+00> : vector<8x8xf32>
    %51 = tpu.matmul %48, %50, %cst_13 {dimension_numbers = #tpu.dot_dimension_numbers<[1], [0], [0], [1], [0, 0, 1, 1], [], []>} : vector<8x16xf32>, vector<16x8xf32>, vector<8x8xf32> -> vector<8x8xf32>
    %cst_14 = arith.constant dense<0xFF800000> : vector<8xf32>
    %52 = vector.multi_reduction <maximumf>, %51, %cst_14 [1] : vector<8x8xf32> to vector<8xf32>
    %53 = vector.shape_cast %52 : vector<8xf32> to vector<8x1xf32>
    %54 = vector.broadcast %53 : vector<8x1xf32> to vector<8x8xf32>
    %55 = arith.subf %51, %54 : vector<8x8xf32>
    %56 = math.exp %55 : vector<8x8xf32>
    %cst_15 = arith.constant dense<0.000000e+00> : vector<8xf32>
    %57 = vector.multi_reduction <add>, %56, %cst_15 [1] : vector<8x8xf32> to vector<8xf32>
    %58 = vector.shape_cast %57 : vector<8xf32> to vector<8x1xf32>
    %59 = tpu.reciprocal %58 {approx = true} : vector<8x1xf32> -> vector<8x1xf32>
    %60 = vector.broadcast %59 : vector<8x1xf32> to vector<8x8xf32>
    %61 = arith.mulf %56, %60 : vector<8x8xf32>
    %62 = vector.extract_strided_slice %47 {offsets = [0, 0], sizes = [8, 16], strides = [1, 1]} : vector<8x32xf32> to vector<8x16xf32>
    %cst_16 = arith.constant dense<0.000000e+00> : vector<8x16xf32>
    %63 = tpu.matmul %61, %62, %cst_16 {dimension_numbers = #tpu.dot_dimension_numbers<[1], [0], [0], [1], [0, 0, 1, 1], [], []>} : vector<8x8xf32>, vector<8x16xf32>, vector<8x16xf32> -> vector<8x16xf32>
    %64 = vector.extract_strided_slice %45 {offsets = [0, 16], sizes = [8, 16], strides = [1, 1]} : vector<8x32xf32> to vector<8x16xf32>
    %65 = vector.extract_strided_slice %46 {offsets = [0, 16], sizes = [8, 16], strides = [1, 1]} : vector<8x32xf32> to vector<8x16xf32>
    %66 = tpu.transpose %65, [1, 0] : vector<8x16xf32> -> vector<16x8xf32>
    %cst_17 = arith.constant dense<0.000000e+00> : vector<8x8xf32>
    %67 = tpu.matmul %64, %66, %cst_17 {dimension_numbers = #tpu.dot_dimension_numbers<[1], [0], [0], [1], [0, 0, 1, 1], [], []>} : vector<8x16xf32>, vector<16x8xf32>, vector<8x8xf32> -> vector<8x8xf32>
    %cst_18 = arith.constant dense<0xFF800000> : vector<8xf32>
    %68 = vector.multi_reduction <maximumf>, %67, %cst_18 [1] : vector<8x8xf32> to vector<8xf32>
    %69 = vector.shape_cast %68 : vector<8xf32> to vector<8x1xf32>
    %70 = vector.broadcast %69 : vector<8x1xf32> to vector<8x8xf32>
    %71 = arith.subf %67, %70 : vector<8x8xf32>
    %72 = math.exp %71 : vector<8x8xf32>
    %cst_19 = arith.constant dense<0.000000e+00> : vector<8xf32>
    %73 = vector.multi_reduction <add>, %72, %cst_19 [1] : vector<8x8xf32> to vector<8xf32>
    %74 = vector.shape_cast %73 : vector<8xf32> to vector<8x1xf32>
    %75 = tpu.reciprocal %74 {approx = true} : vector<8x1xf32> -> vector<8x1xf32>
    %76 = vector.broadcast %75 : vector<8x1xf32> to vector<8x8xf32>
    %77 = arith.mulf %72, %76 : vector<8x8xf32>
    %78 = vector.extract_strided_slice %47 {offsets = [0, 16], sizes = [8, 16], strides = [1, 1]} : vector<8x32xf32> to vector<8x16xf32>
    %cst_20 = arith.constant dense<0.000000e+00> : vector<8x16xf32>
    %79 = tpu.matmul %77, %78, %cst_20 {dimension_numbers = #tpu.dot_dimension_numbers<[1], [0], [0], [1], [0, 0, 1, 1], [], []>} : vector<8x8xf32>, vector<8x16xf32>, vector<8x16xf32> -> vector<8x16xf32>
    %80 = tpu.concatenate %63, %79 in 1 : vector<8x16xf32>, vector<8x16xf32> -> vector<8x32xf32>
    %81 = tpu.concatenate %44, %80 in 0 : vector<8x32xf32>, vector<8x32xf32> -> vector<16x32xf32>
    %c0_21 = arith.constant 0 : index
    %c0_22 = arith.constant 0 : index
    %82 = vector.load %arg4[%c0_21, %c0_22] : memref<32x32xf32, #tpu.memory_space<vmem>>, vector<32x32xf32>
    %cst_23 = arith.constant dense<0.000000e+00> : vector<16x32xf32>
    %83 = tpu.matmul %81, %82, %cst_23 {dimension_numbers = #tpu.dot_dimension_numbers<[1], [0], [0], [1], [0, 0, 1, 1], [], []>} : vector<16x32xf32>, vector<32x32xf32>, vector<16x32xf32> -> vector<16x32xf32>
    %c0_24 = arith.constant 0 : index
    %c0_25 = arith.constant 0 : index
    %84 = vector.load %arg5[%c0_24, %c0_25] : memref<1x32xf32, #tpu.memory_space<vmem>>, vector<1x32xf32>
    %85 = vector.broadcast %84 : vector<1x32xf32> to vector<16x32xf32>
    %86 = arith.addf %83, %85 : vector<16x32xf32>
    %87 = vector.extract_strided_slice %0 {offsets = [0, 0], sizes = [16, 32], strides = [1, 1]} : vector<32x32xf32> to vector<16x32xf32>
    %88 = arith.addf %87, %86 : vector<16x32xf32>
    %cst_26 = arith.constant dense<0.000000e+00> : vector<16xf32>
    %89 = vector.multi_reduction <add>, %88, %cst_26 [1] : vector<16x32xf32> to vector<16xf32>
    %90 = vector.shape_cast %89 : vector<16xf32> to vector<16x1xf32>
    %cst_27 = arith.constant 3.200000e+01 : f32
    %91 = vector.broadcast %cst_27 : f32 to vector<16x1xf32>
    %92 = arith.divf %90, %91 : vector<16x1xf32>
    %93 = vector.broadcast %92 : vector<16x1xf32> to vector<16x32xf32>
    %94 = arith.subf %88, %93 : vector<16x32xf32>
    %95 = arith.mulf %94, %94 : vector<16x32xf32>
    %cst_28 = arith.constant dense<0.000000e+00> : vector<16xf32>
    %96 = vector.multi_reduction <add>, %95, %cst_28 [1] : vector<16x32xf32> to vector<16xf32>
    %97 = vector.shape_cast %96 : vector<16xf32> to vector<16x1xf32>
    %cst_29 = arith.constant 3.200000e+01 : f32
    %98 = vector.broadcast %cst_29 : f32 to vector<16x1xf32>
    %99 = arith.divf %97, %98 : vector<16x1xf32>
    %100 = vector.broadcast %92 : vector<16x1xf32> to vector<16x32xf32>
    %101 = arith.subf %88, %100 : vector<16x32xf32>
    %cst_30 = arith.constant 9.99999974E-6 : f32
    %102 = vector.broadcast %cst_30 : f32 to vector<16x1xf32>
    %103 = arith.addf %99, %102 : vector<16x1xf32>
    %104 = math.rsqrt %103 : vector<16x1xf32>
    %105 = vector.broadcast %104 : vector<16x1xf32> to vector<16x32xf32>
    %106 = arith.mulf %101, %105 : vector<16x32xf32>
    %c0_31 = arith.constant 0 : index
    %c0_32 = arith.constant 0 : index
    %107 = vector.load %arg10[%c0_31, %c0_32] : memref<1x32xf32, #tpu.memory_space<vmem>>, vector<1x32xf32>
    %108 = vector.broadcast %107 : vector<1x32xf32> to vector<16x32xf32>
    %109 = arith.mulf %106, %108 : vector<16x32xf32>
    %c0_33 = arith.constant 0 : index
    %c0_34 = arith.constant 0 : index
    %110 = vector.load %arg11[%c0_33, %c0_34] : memref<1x32xf32, #tpu.memory_space<vmem>>, vector<1x32xf32>
    %111 = vector.broadcast %110 : vector<1x32xf32> to vector<16x32xf32>
    %112 = arith.addf %109, %111 : vector<16x32xf32>
    %c0_35 = arith.constant 0 : index
    %c0_36 = arith.constant 0 : index
    %113 = vector.load %arg6[%c0_35, %c0_36] : memref<32x64xf32, #tpu.memory_space<vmem>>, vector<32x64xf32>
    %cst_37 = arith.constant dense<0.000000e+00> : vector<16x64xf32>
    %114 = tpu.matmul %112, %113, %cst_37 {dimension_numbers = #tpu.dot_dimension_numbers<[1], [0], [0], [1], [0, 0, 1, 1], [], []>} : vector<16x32xf32>, vector<32x64xf32>, vector<16x64xf32> -> vector<16x64xf32>
    %c0_38 = arith.constant 0 : index
    %c0_39 = arith.constant 0 : index
    %115 = vector.load %arg7[%c0_38, %c0_39] : memref<1x64xf32, #tpu.memory_space<vmem>>, vector<1x64xf32>
    %116 = vector.broadcast %115 : vector<1x64xf32> to vector<16x64xf32>
    %117 = arith.addf %114, %116 : vector<16x64xf32>
    %cst_40 = arith.constant 0.000000e+00 : f32
    %118 = vector.broadcast %cst_40 : f32 to vector<16x64xf32>
    %119 = arith.maximumf %117, %118 : vector<16x64xf32>
    %c0_41 = arith.constant 0 : index
    %c0_42 = arith.constant 0 : index
    %120 = vector.load %arg8[%c0_41, %c0_42] : memref<64x32xf32, #tpu.memory_space<vmem>>, vector<64x32xf32>
    %cst_43 = arith.constant dense<0.000000e+00> : vector<16x32xf32>
    %121 = tpu.matmul %119, %120, %cst_43 {dimension_numbers = #tpu.dot_dimension_numbers<[1], [0], [0], [1], [0, 0, 1, 1], [], []>} : vector<16x64xf32>, vector<64x32xf32>, vector<16x32xf32> -> vector<16x32xf32>
    %c0_44 = arith.constant 0 : index
    %c0_45 = arith.constant 0 : index
    %122 = vector.load %arg9[%c0_44, %c0_45] : memref<1x32xf32, #tpu.memory_space<vmem>>, vector<1x32xf32>
    %123 = vector.broadcast %122 : vector<1x32xf32> to vector<16x32xf32>
    %124 = arith.addf %121, %123 : vector<16x32xf32>
    %125 = arith.addf %112, %124 : vector<16x32xf32>
    %cst_46 = arith.constant dense<0.000000e+00> : vector<16xf32>
    %126 = vector.multi_reduction <add>, %125, %cst_46 [1] : vector<16x32xf32> to vector<16xf32>
    %127 = vector.shape_cast %126 : vector<16xf32> to vector<16x1xf32>
    %cst_47 = arith.constant 3.200000e+01 : f32
    %128 = vector.broadcast %cst_47 : f32 to vector<16x1xf32>
    %129 = arith.divf %127, %128 : vector<16x1xf32>
    %130 = vector.broadcast %129 : vector<16x1xf32> to vector<16x32xf32>
    %131 = arith.subf %125, %130 : vector<16x32xf32>
    %132 = arith.mulf %131, %131 : vector<16x32xf32>
    %cst_48 = arith.constant dense<0.000000e+00> : vector<16xf32>
    %133 = vector.multi_reduction <add>, %132, %cst_48 [1] : vector<16x32xf32> to vector<16xf32>
    %134 = vector.shape_cast %133 : vector<16xf32> to vector<16x1xf32>
    %cst_49 = arith.constant 3.200000e+01 : f32
    %135 = vector.broadcast %cst_49 : f32 to vector<16x1xf32>
    %136 = arith.divf %134, %135 : vector<16x1xf32>
    %137 = vector.broadcast %129 : vector<16x1xf32> to vector<16x32xf32>
    %138 = arith.subf %125, %137 : vector<16x32xf32>
    %cst_50 = arith.constant 9.99999974E-6 : f32
    %139 = vector.broadcast %cst_50 : f32 to vector<16x1xf32>
    %140 = arith.addf %136, %139 : vector<16x1xf32>
    %141 = math.rsqrt %140 : vector<16x1xf32>
    %142 = vector.broadcast %141 : vector<16x1xf32> to vector<16x32xf32>
    %143 = arith.mulf %138, %142 : vector<16x32xf32>
    %c0_51 = arith.constant 0 : index
    %c0_52 = arith.constant 0 : index
    %144 = vector.load %arg12[%c0_51, %c0_52] : memref<1x32xf32, #tpu.memory_space<vmem>>, vector<1x32xf32>
    %145 = vector.broadcast %144 : vector<1x32xf32> to vector<16x32xf32>
    %146 = arith.mulf %143, %145 : vector<16x32xf32>
    %c0_53 = arith.constant 0 : index
    %c0_54 = arith.constant 0 : index
    %147 = vector.load %arg13[%c0_53, %c0_54] : memref<1x32xf32, #tpu.memory_space<vmem>>, vector<1x32xf32>
    %148 = vector.broadcast %147 : vector<1x32xf32> to vector<16x32xf32>
    %149 = arith.addf %146, %148 : vector<16x32xf32>
    %c0_55 = arith.constant 0 : index
    %c0_56 = arith.constant 0 : index
    %150 = vector.load %arg14[%c0_55, %c0_56] : memref<16x32xf32, #tpu.memory_space<vmem>>, vector<16x32xf32>
    tpu.vector_store %arg14[%c0_55, %c0_56], %149 {strides = array<i32>} : memref<16x32xf32, #tpu.memory_space<vmem>>, vector<16x32xf32>,
    return
  }
  func.func @transform_0(%arg0: i32) -> (i32, i32) {
    %c0_i32 = arith.constant 0 : i32
    %c0_i32_0 = arith.constant 0 : i32
    %c0_i32_1 = arith.constant 0 : i32
    return %c0_i32, %c0_i32_0 : i32, i32
  }
  func.func @transform_1(%arg0: i32) -> (i32, i32) {
    %c0_i32 = arith.constant 0 : i32
    %c0_i32_0 = arith.constant 0 : i32
    %c0_i32_1 = arith.constant 0 : i32
    return %c0_i32, %c0_i32_0 : i32, i32
  }
  func.func @transform_2(%arg0: i32) -> (i32, i32) {
    %c0_i32 = arith.constant 0 : i32
    %c0_i32_0 = arith.constant 0 : i32
    %c0_i32_1 = arith.constant 0 : i32
    return %c0_i32, %c0_i32_0 : i32, i32
  }
  func.func @transform_3(%arg0: i32) -> (i32, i32) {
    %c0_i32 = arith.constant 0 : i32
    %c0_i32_0 = arith.constant 0 : i32
    %c0_i32_1 = arith.constant 0 : i32
    return %c0_i32, %c0_i32_0 : i32, i32
  }
  func.func @transform_4(%arg0: i32) -> (i32, i32) {
    %c0_i32 = arith.constant 0 : i32
    %c0_i32_0 = arith.constant 0 : i32
    %c0_i32_1 = arith.constant 0 : i32
    return %c0_i32, %c0_i32_0 : i32, i32
  }
  func.func @transform_5(%arg0: i32) -> (i32, i32) {
    %c0_i32 = arith.constant 0 : i32
    %c0_i32_0 = arith.constant 0 : i32
    %c0_i32_1 = arith.constant 0 : i32
    return %c0_i32, %c0_i32_0 : i32, i32
  }
  func.func @transform_6(%arg0: i32) -> (i32, i32) {
    %c0_i32 = arith.constant 0 : i32
    %c0_i32_0 = arith.constant 0 : i32
    %c0_i32_1 = arith.constant 0 : i32
    return %c0_i32, %c0_i32_0 : i32, i32
  }
  func.func @transform_7(%arg0: i32) -> (i32, i32) {
    %c0_i32 = arith.constant 0 : i32
    %c0_i32_0 = arith.constant 0 : i32
    %c0_i32_1 = arith.constant 0 : i32
    return %c0_i32, %c0_i32_0 : i32, i32
  }
  func.func @transform_8(%arg0: i32) -> (i32, i32) {
    %c0_i32 = arith.constant 0 : i32
    %c0_i32_0 = arith.constant 0 : i32
    %c0_i32_1 = arith.constant 0 : i32
    return %c0_i32, %c0_i32_0 : i32, i32
  }
  func.func @transform_9(%arg0: i32) -> (i32, i32) {
    %c0_i32 = arith.constant 0 : i32
    %c0_i32_0 = arith.constant 0 : i32
    %c0_i32_1 = arith.constant 0 : i32
    return %c0_i32, %c0_i32_0 : i32, i32
  }
  func.func @transform_10(%arg0: i32) -> (i32, i32) {
    %c0_i32 = arith.constant 0 : i32
    %c0_i32_0 = arith.constant 0 : i32
    %c0_i32_1 = arith.constant 0 : i32
    return %c0_i32, %c0_i32_0 : i32, i32
  }
  func.func @transform_11(%arg0: i32) -> (i32, i32) {
    %c0_i32 = arith.constant 0 : i32
    %c0_i32_0 = arith.constant 0 : i32
    %c0_i32_1 = arith.constant 0 : i32
    return %c0_i32, %c0_i32_0 : i32, i32
  }
  func.func @transform_12(%arg0: i32) -> (i32, i32) {
    %c0_i32 = arith.constant 0 : i32
    %c0_i32_0 = arith.constant 0 : i32
    %c0_i32_1 = arith.constant 0 : i32
    return %c0_i32, %c0_i32_0 : i32, i32
  }
  func.func @transform_13(%arg0: i32) -> (i32, i32) {
    %c0_i32 = arith.constant 0 : i32
    %c0_i32_0 = arith.constant 0 : i32
    %c0_i32_1 = arith.constant 0 : i32
    return %c0_i32, %c0_i32_0 : i32, i32
  }
}

</mosaic_0001>

<llo_original>
// kernel: tpu_custom_call.1
$region0: #{tpu_custom_call.1}
  #allocation0 [shape = 'u32[]', space=smem, size = 0x4, offset = 0x4, fixed_abs, tag = 'smem constant byte address 0x4 - core index']
  #allocation1 [shape = 'u32[144,128]{1,0:T(1,128)}', space=vmem, size = 0x12000, scoped, tag = 'internal scratch']
  %s0 = inlined_call_operand.vmem [shape: f32[32,32], index: 0, kind: input, shape index: {}]
  %s1 = inlined_call_operand.vmem [shape: f32[32,96], index: 1, kind: input, shape index: {}]
  %s2 = inlined_call_operand.vmem [shape: f32[1,96], index: 2, kind: input, shape index: {}]
  %s3 = inlined_call_operand.vmem [shape: f32[32,32], index: 3, kind: input, shape index: {}]
  %s4 = inlined_call_operand.vmem [shape: f32[1,32], index: 4, kind: input, shape index: {}]
  %s5 = inlined_call_operand.hbm [shape: f32[32,64], index: 5, kind: input, shape index: {}]
  %s6 = inlined_call_operand.vmem [shape: f32[1,64], index: 6, kind: input, shape index: {}]
  %s7 = inlined_call_operand.vmem [shape: f32[64,32], index: 7, kind: input, shape index: {}]
  %s8 = inlined_call_operand.vmem [shape: f32[1,32], index: 8, kind: input, shape index: {}]
  %s9 = inlined_call_operand.vmem [shape: f32[1,32], index: 9, kind: input, shape index: {}]
  %s10 = inlined_call_operand.vmem [shape: f32[1,32], index: 10, kind: input, shape index: {}]
  %s11 = inlined_call_operand.vmem [shape: f32[1,32], index: 11, kind: input, shape index: {}]
  %s12 = inlined_call_operand.vmem [shape: f32[1,32], index: 12, kind: input, shape index: {}]
  %s13 = inlined_call_operand.hbm [shape: f32[16,32], index: 13, kind: output, shape index: {}]
  %s14 = sld [smem:[#allocation0]]
  $region66: #{tpu_custom_call.1} parent=0
    _
  %s16 = ssub.s32 1, %s14
  %s17 = scalar_select 0, %s16, %s14
  $region1: #{tpu_custom_call.1} parent=0
    #allocation2 [shape = 'u8[16384]{0}', space=vmem, size = 0x4000, scoped, tag = 'input window, operand 5, single buffered']
    #allocation3 [shape = 's32[1]{0}', space=sflag, size = 0x4, scoped, tag = 'scoped memory for tpu_custom_call.1']
    #allocation4 [shape = 's32[1]{0}', space=sflag, size = 0x4, scoped, tag = 'scoped memory for tpu_custom_call.1']
    #allocation5 [shape = 'u8[8192]{0}', space=vmem, size = 0x2000, scoped, tag = 'output window, operand 0, single buffered']
    %18 = vsyncpa [#allocation3], 0
    %19 = vsyncpa [#allocation4], 0
    // Predicated region
    $region2: #{tpu_custom_call.1} parent=1 // pred_check
      _
    $region3: #{tpu_custom_call.1} parent=1 // pred_check_branch
      %21 = sbr.rel (0) target = $region5
    $region4: #{tpu_custom_call.1} parent=1 // pred_region
      _
    $region5: #{tpu_custom_call.1} parent=1 // pred_fallthru
      _
    // Predicated region
    $region6: #{tpu_custom_call.1} parent=1 // pred_check
      _
    $region7: #{tpu_custom_call.1} parent=1 // pred_check_branch
      %23 = sbr.rel (0) target = $region9
    $region8: #{tpu_custom_call.1} parent=1 // pred_region
      _
    $region9: #{tpu_custom_call.1} parent=1 // pred_fallthru
      _
    // Predicated region
    $region10: #{tpu_custom_call.1} parent=1 // pred_check
      _
    $region11: #{tpu_custom_call.1} parent=1 // pred_check_branch
      %25 = sbr.rel (0) target = $region13
    $region12: #{tpu_custom_call.1} parent=1 // pred_region
      _
    $region13: #{tpu_custom_call.1} parent=1 // pred_fallthru
      _
    // Predicated region
    $region14: #{tpu_custom_call.1} parent=1 // pred_check
      _
    $region15: #{tpu_custom_call.1} parent=1 // pred_check_branch
      %27 = sbr.rel (0) target = $region17
    $region16: #{tpu_custom_call.1} parent=1 // pred_region
      _
    $region17: #{tpu_custom_call.1} parent=1 // pred_fallthru
      _
    // Predicated region
    $region18: #{tpu_custom_call.1} parent=1 // pred_check
      _
    $region19: #{tpu_custom_call.1} parent=1 // pred_check_branch
      %29 = sbr.rel (0) target = $region21
    $region20: #{tpu_custom_call.1} parent=1 // pred_region
      _
    $region21: #{tpu_custom_call.1} parent=1 // pred_fallthru
      _
    // Predicated region
    $region22: #{tpu_custom_call.1} parent=1 // pred_check
      _
    $region23: #{tpu_custom_call.1} parent=1 // pred_check_branch
      %31 = sbr.rel (0) target = $region25
    $region24: #{tpu_custom_call.1} parent=1 // pred_region
      %s33 = ssub.s32 512, 512
      %34 = vsyncadd [#allocation3], %s33
      %s35 = sshll.u32 [#allocation2], 4
      %s36 = int_to_ptr.vmem [resolvable:$true] %s35
      %41 = dma.hbm_to_vmem [thread:$0]  %s5, 512, %s36, [#allocation3], 128, 128, 8
    $region25: #{tpu_custom_call.1} parent=1 // pred_fallthru
      _
    // Predicated region
    $region26: #{tpu_custom_call.1} parent=1 // pred_check
      _
    $region27: #{tpu_custom_call.1} parent=1 // pred_check_branch
      %43 = sbr.rel (0) target = $region29
    $region28: #{tpu_custom_call.1} parent=1 // pred_region
      _
    $region29: #{tpu_custom_call.1} parent=1 // pred_fallthru
      _
    // Predicated region
    $region30: #{tpu_custom_call.1} parent=1 // pred_check
      _
    $region31: #{tpu_custom_call.1} parent=1 // pred_check_branch
      %45 = sbr.rel (0) target = $region33
    $region32: #{tpu_custom_call.1} parent=1 // pred_region
      _
    $region33: #{tpu_custom_call.1} parent=1 // pred_fallthru
      _
    // Predicated region
    $region34: #{tpu_custom_call.1} parent=1 // pred_check
      _
    $region35: #{tpu_custom_call.1} parent=1 // pred_check_branch
      %47 = sbr.rel (0) target = $region37
    $region36: #{tpu_custom_call.1} parent=1 // pred_region
      _
    $region37: #{tpu_custom_call.1} parent=1 // pred_fallthru
      _
    // Predicated region
    $region38: #{tpu_custom_call.1} parent=1 // pred_check
      _
    $region39: #{tpu_custom_call.1} parent=1 // pred_check_branch
      %49 = sbr.rel (0) target = $region41
    $region40: #{tpu_custom_call.1} parent=1 // pred_region
      _
    $region41: #{tpu_custom_call.1} parent=1 // pred_fallthru
      _
    // Predicated region
    $region42: #{tpu_custom_call.1} parent=1 // pred_check
      _
    $region43: #{tpu_custom_call.1} parent=1 // pred_check_branch
      %51 = sbr.rel (0) target = $region45
    $region44: #{tpu_custom_call.1} parent=1 // pred_region
      _
    $region45: #{tpu_custom_call.1} parent=1 // pred_fallthru
      _
    // Predicated region
    $region46: #{tpu_custom_call.1} parent=1 // pred_check
      _
    $region47: #{tpu_custom_call.1} parent=1 // pred_check_branch
      %53 = sbr.rel (0) target = $region49
    $region48: #{tpu_custom_call.1} parent=1 // pred_region
      _
    $region49: #{tpu_custom_call.1} parent=1 // pred_fallthru
      _
    // Predicated region
    $region50: #{tpu_custom_call.1} parent=1 // pred_check
      _
    $region51: #{tpu_custom_call.1} parent=1 // pred_check_branch
      %55 = sbr.rel (0) target = $region53
    $region52: #{tpu_custom_call.1} parent=1 // pred_region
      _
    $region53: #{tpu_custom_call.1} parent=1 // pred_fallthru
      _
    // Predicated region
    $region54: #{tpu_custom_call.1} parent=1 // pred_check
      _
    $region55: #{tpu_custom_call.1} parent=1 // pred_check_branch
      %57 = sbr.rel (0) target = $region57
    $region56: #{tpu_custom_call.1} parent=1 // pred_region
      %58 = dma.done [#allocation3], 512
    $region57: #{tpu_custom_call.1} parent=1 // pred_fallthru
      _
    %v59 = vld [vmem:[%s0] sm:$0xff]
    %v60 = vld [vmem:[%s0 + $0x8] sm:$0xff]
    %v61 = vld [vmem:[%s0 + $0x10] sm:$0xff]
    %v62 = vld [vmem:[%s0 + $0x18] sm:$0xff]
    %v63 = vld [vmem:[%s1] sm:$0xff]
    %v64 = vld [vmem:[%s1 + $0x8] sm:$0xff]
    %v65 = vld [vmem:[%s1 + $0x10] sm:$0xff]
    %v66 = vld [vmem:[%s1 + $0x18] sm:$0xff]
    %v67 = vld [vmem:[%s2] sm:$0x1]
    %v69 = vlaneseq
    %v70 = vshrl.u32 %v69, 7
    %v71 = vsub.s32 0, %v70
    %v72 = vrot.slane %v67, %v71
    %vm74 = vcmask 261120
    %v76 = vsel %vm74, %v59, 0
    %v79 = vsel %vm74, %v60, 0
    %v82 = vsel %vm74, %v61, 0
    %v85 = vsel %vm74, %v62, 0
    %87 = vmatprep.subr.mxu0 0.0
    %88 = vmatpush1.msra.mxu0 %v63
    %89 = vmatprep.subr.mxu0 0.0
    %90 = vmatpush1.msra.mxu0 %v64
    %91 = vmatprep.subr.mxu0 0.0
    %92 = vmatpush1.msra.mxu0 %v65
    %93 = vmatprep.subr.mxu0 0.0
    %94 = vmatpush1.msra.mxu0 %v66
    %95 = vmatprep.subr.mxu0 0.0
    %96 = vmatpush1.msra.mxu0 0.0
    %97 = vmatprep.subr.mxu0 0.0
    %98 = vmatpush1.msra.mxu0 0.0
    %99 = vmatprep.subr.mxu0 0.0
    %100 = vmatpush1.msra.mxu0 0.0
    %101 = vmatprep.subr.mxu0 0.0
    %102 = vmatpush1.msra.mxu0 0.0
    %103 = vmatprep.subr.mxu0 0.0
    %104 = vmatpush1.msra.mxu0 0.0
    %105 = vmatprep.subr.mxu0 0.0
    %106 = vmatpush1.msra.mxu0 0.0
    %107 = vmatprep.subr.mxu0 0.0
    %108 = vmatpush1.msra.mxu0 0.0
    %109 = vmatprep.subr.mxu0 0.0
    %110 = vmatpush1.msra.mxu0 0.0
    %111 = vmatprep.subr.mxu0 0.0
    %112 = vmatpush1.msra.mxu0 0.0
    %113 = vmatprep.subr.mxu0 0.0
    %114 = vmatpush1.msra.mxu0 0.0
    %115 = vmatprep.subr.mxu0 0.0
    %116 = vmatpush1.msra.mxu0 0.0
    %117 = vmatprep.subr.mxu0 0.0
    %118 = vmatpush1.msra.mxu0 0.0
    %119 = vmatprep.subr.mxu0 0.0
    %120 = vmatpush1.msra.mxu0 0.0
    %121 = vmatprep.subr.mxu0 0.0
    %122 = vmatpush1.msra.mxu0 0.0
    %123 = vmatprep.subr.mxu0 0.0
    %124 = vmatpush1.msra.mxu0 0.0
    %125 = vmatprep.subr.mxu0 0.0
    %126 = vmatpush1.msra.mxu0 0.0
    %127 = vmatprep.subr.mxu0 0.0
    %128 = vmatpush1.msra.mxu0 0.0
    %129 = vmatprep.subr.mxu0 0.0
    %130 = vmatpush1.msra.mxu0 0.0
    %131 = vmatprep.subr.mxu0 0.0
    %132 = vmatpush1.msra.mxu0 0.0
    %133 = vmatprep.subr.mxu0 0.0
    %134 = vmatpush1.msra.mxu0 0.0
    %135 = vmatprep.subr.mxu0 0.0
    %136 = vmatpush1.msra.mxu0 0.0
    %137 = vmatprep.subr.mxu0 0.0
    %138 = vmatpush1.msra.mxu0 0.0
    %139 = vmatprep.subr.mxu0 0.0
    %140 = vmatpush1.msra.mxu0 0.0
    %141 = vmatprep.subr.mxu0 0.0
    %142 = vmatpush1.msra.mxu0 0.0
    %143 = vmatprep.subr.mxu0 0.0
    %144 = vmatpush1.msra.mxu0 0.0
    %145 = vmatprep.subr.mxu0 0.0
    %146 = vmatpush1.msra.mxu0 0.0
    %147 = vmatprep.subr.mxu0 0.0
    %148 = vmatpush1.msra.mxu0 0.0
    %149 = vmatprep.subr.mxu0 0.0
    %150 = vmatpush1.msra.mxu0 0.0
    %151 = vmatprep.mubr.f32.mxu0 0.0
    %152 = vmatmul.mubr.f32.gmra.mrb[0].mxu0 %v76
    %v153 = vpop.f32.mrb[0].mxu0
    %v154 = vadd.f32 %v72, %v153
    %v155 = vpop.f32.mrb[0].mxu0
    %156 = vmatprep.mubr.f32.mxu0 0.0
    %157 = vmatmul.mubr.f32.gmra.mrb[0].mxu0 %v79
    %v158 = vpop.f32.mrb[0].mxu0
    %v159 = vadd.f32 %v72, %v158
    %v160 = vpop.f32.mrb[0].mxu0
    %161 = vmatprep.mubr.f32.mxu0 0.0
    %162 = vmatmul.mubr.f32.gmra.mrb[0].mxu0 %v82
    %v163 = vpop.f32.mrb[0].mxu0
    %v164 = vadd.f32 %v72, %v163
    %v165 = vpop.f32.mrb[0].mxu0
    %166 = vmatprep.mubr.f32.mxu0 0.0
    %167 = vmatmul.mubr.f32.gmra.mrb[0].mxu0 %v85
    %v168 = vpop.f32.mrb[0].mxu0
    %v169 = vadd.f32 %v72, %v168
    %v170 = vpop.f32.mrb[0].mxu0
    %171 = vdwg.mxu0
    %173 = vrot.lane.b32.xlu0 %v164, 96
    %v174 = vpop.permute.xlu0 %173
    %vm175 = vcmask 130048
    %v177 = vsel %vm175, %v154, 0
    %v179 = vsel %vm175, %v174, 0
    %181 = vmatprep.subr.mxu0 0.0
    %182 = vmatpush1.xpose.msra.mxu0 %v179
    %183 = vmatprep.subr.mxu0 0.0
    %184 = vmatpush1.xpose.msra.mxu0 0.0
    %185 = vmatprep.subr.mxu0 0.0
    %186 = vmatpush1.xpose.msra.mxu0 0.0
    %187 = vmatprep.subr.mxu0 0.0
    %188 = vmatpush1.xpose.msra.mxu0 0.0
    %189 = vmatprep.subr.mxu0 0.0
    %190 = vmatpush1.xpose.msra.mxu0 0.0
    %191 = vmatprep.subr.mxu0 0.0
    %192 = vmatpush1.xpose.msra.mxu0 0.0
    %193 = vmatprep.subr.mxu0 0.0
    %194 = vmatpush1.xpose.msra.mxu0 0.0
    %195 = vmatprep.subr.mxu0 0.0
    %196 = vmatpush1.xpose.msra.mxu0 0.0
    %197 = vmatprep.subr.mxu0 0.0
    %198 = vmatpush1.xpose.msra.mxu0 0.0
    %199 = vmatprep.subr.mxu0 0.0
    %200 = vmatpush1.xpose.msra.mxu0 0.0
    %201 = vmatprep.subr.mxu0 0.0
    %202 = vmatpush1.xpose.msra.mxu0 0.0
    %203 = vmatprep.subr.mxu0 0.0
    %204 = vmatpush1.xpose.msra.mxu0 0.0
    %205 = vmatprep.subr.mxu0 0.0
    %206 = vmatpush1.xpose.msra.mxu0 0.0
    %207 = vmatprep.subr.mxu0 0.0
    %208 = vmatpush1.xpose.msra.mxu0 0.0
    %209 = vmatprep.subr.mxu0 0.0
    %210 = vmatpush1.xpose.msra.mxu0 0.0
    %211 = vmatprep.subr.mxu0 0.0
    %212 = vmatpush1.xpose.msra.mxu0 0.0
    %213 = vmatprep.subr.mxu0 0.0
    %214 = vmatpush1.xpose.msra.mxu0 0.0
    %215 = vmatprep.subr.mxu0 0.0
    %216 = vmatpush1.xpose.msra.mxu0 0.0
    %217 = vmatprep.subr.mxu0 0.0
    %218 = vmatpush1.xpose.msra.mxu0 0.0
    %219 = vmatprep.subr.mxu0 0.0
    %220 = vmatpush1.xpose.msra.mxu0 0.0
    %221 = vmatprep.subr.mxu0 0.0
    %222 = vmatpush1.xpose.msra.mxu0 0.0
    %223 = vmatprep.subr.mxu0 0.0
    %224 = vmatpush1.xpose.msra.mxu0 0.0
    %225 = vmatprep.subr.mxu0 0.0
    %226 = vmatpush1.xpose.msra.mxu0 0.0
    %227 = vmatprep.subr.mxu0 0.0
    %228 = vmatpush1.xpose.msra.mxu0 0.0
    %229 = vmatprep.subr.mxu0 0.0
    %230 = vmatpush1.xpose.msra.mxu0 0.0
    %231 = vmatprep.subr.mxu0 0.0
    %232 = vmatpush1.xpose.msra.mxu0 0.0
    %233 = vmatprep.subr.mxu0 0.0
    %234 = vmatpush1.xpose.msra.mxu0 0.0
    %235 = vmatprep.subr.mxu0 0.0
    %236 = vmatpush1.xpose.msra.mxu0 0.0
    %237 = vmatprep.subr.mxu0 0.0
    %238 = vmatpush1.xpose.msra.mxu0 0.0
    %239 = vmatprep.subr.mxu0 0.0
    %240 = vmatpush1.xpose.msra.mxu0 0.0
    %241 = vmatprep.subr.mxu0 0.0
    %242 = vmatpush1.xpose.msra.mxu0 0.0
    %243 = vmatprep.subr.mxu0 0.0
    %244 = vmatpush1.xpose.msra.mxu0 0.0
    %245 = vmatprep.mubr.f32.mxu0 0.0
    %246 = vmatmul.mubr.f32.gmra.mrb[0].mxu0 %v177
    %v247 = vpop.f32.mrb[0].mxu0
    %v248 = vadd.f32 0.0, %v247
    %v249 = vpop.f32.mrb[0].mxu0
    %250 = vdwg.mxu0
    %vm251 = vcmask 64512
    %v252 = vsel %vm251, %v248, -inf
    %253 = vmax.xlane.f32.xlu0 %v252
    %v254 = vpop.xlane.xlu0 %253
    %v255 = vsub.f32 %v248, %v254
    %v256 = vmul.f32 %v255, 1.442695
    %v257 = vpow.pop %v256
    %v258 = vsel %vm251, %v257, 0.0
    %259 = vadd.xlane.f32.xlu0 %v258
    %v260 = vpop.xlane.xlu0 %259
    %v261 = vrcp.pop %v260
    %v262 = vmul.f32 %v257, %v261
    %263 = vrot.lane.b32.xlu0 %v164, 64
    %v264 = vpop.permute.xlu0 %263
    %v267 = vsel %vm251, %v262, 0
    %269 = vmatprep.subr.mxu0 0.0
    %270 = vmatpush1.msra.mxu0 %v264
    %271 = vmatprep.subr.mxu0 0.0
    %272 = vmatpush1.msra.mxu0 0.0
    %273 = vmatprep.subr.mxu0 0.0
    %274 = vmatpush1.msra.mxu0 0.0
    %275 = vmatprep.subr.mxu0 0.0
    %276 = vmatpush1.msra.mxu0 0.0
    %277 = vmatprep.subr.mxu0 0.0
    %278 = vmatpush1.msra.mxu0 0.0
    %279 = vmatprep.subr.mxu0 0.0
    %280 = vmatpush1.msra.mxu0 0.0
    %281 = vmatprep.subr.mxu0 0.0
    %282 = vmatpush1.msra.mxu0 0.0
    %283 = vmatprep.subr.mxu0 0.0
    %284 = vmatpush1.msra.mxu0 0.0
    %285 = vmatprep.subr.mxu0 0.0
    %286 = vmatpush1.msra.mxu0 0.0
    %287 = vmatprep.subr.mxu0 0.0
    %288 = vmatpush1.msra.mxu0 0.0
    %289 = vmatprep.subr.mxu0 0.0
    %290 = vmatpush1.msra.mxu0 0.0
    %291 = vmatprep.subr.mxu0 0.0
    %292 = vmatpush1.msra.mxu0 0.0
    %293 = vmatprep.subr.mxu0 0.0
    %294 = vmatpush1.msra.mxu0 0.0
    %295 = vmatprep.subr.mxu0 0.0
    %296 = vmatpush1.msra.mxu0 0.0
    %297 = vmatprep.subr.mxu0 0.0
    %298 = vmatpush1.msra.mxu0 0.0
    %299 = vmatprep.subr.mxu0 0.0
    %300 = vmatpush1.msra.mxu0 0.0
    %301 = vmatprep.subr.mxu0 0.0
    %302 = vmatpush1.msra.mxu0 0.0
    %303 = vmatprep.subr.mxu0 0.0
    %304 = vmatpush1.msra.mxu0 0.0
    %305 = vmatprep.subr.mxu0 0.0
    %306 = vmatpush1.msra.mxu0 0.0
    %307 = vmatprep.subr.mxu0 0.0
    %308 = vmatpush1.msra.mxu0 0.0
    %309 = vmatprep.subr.mxu0 0.0
    %310 = vmatpush1.msra.mxu0 0.0
    %311 = vmatprep.subr.mxu0 0.0
    %312 = vmatpush1.msra.mxu0 0.0
    %313 = vmatprep.subr.mxu0 0.0
    %314 = vmatpush1.msra.mxu0 0.0
    %315 = vmatprep.subr.mxu0 0.0
    %316 = vmatpush1.msra.mxu0 0.0
    %317 = vmatprep.subr.mxu0 0.0
    %318 = vmatpush1.msra.mxu0 0.0
    %319 = vmatprep.subr.mxu0 0.0
    %320 = vmatpush1.msra.mxu0 0.0
    %321 = vmatprep.subr.mxu0 0.0
    %322 = vmatpush1.msra.mxu0 0.0
    %323 = vmatprep.subr.mxu0 0.0
    %324 = vmatpush1.msra.mxu0 0.0
    %325 = vmatprep.subr.mxu0 0.0
    %326 = vmatpush1.msra.mxu0 0.0
    %327 = vmatprep.subr.mxu0 0.0
    %328 = vmatpush1.msra.mxu0 0.0
    %329 = vmatprep.subr.mxu0 0.0
    %330 = vmatpush1.msra.mxu0 0.0
    %331 = vmatprep.subr.mxu0 0.0
    %332 = vmatpush1.msra.mxu0 0.0
    %333 = vmatprep.mubr.f32.mxu0 0.0
    %334 = vmatmul.mubr.f32.gmra.mrb[0].mxu0 %v267
    %v335 = vpop.f32.mrb[0].mxu0
    %v336 = vadd.f32 0.0, %v335
    %v337 = vpop.f32.mrb[0].mxu0
    %338 = vdwg.mxu0
    %339 = vrot.lane.b32.xlu0 %v154, 112
    %v340 = vpop.permute.xlu0 %339
    %341 = vrot.lane.b32.xlu0 %v164, 80
    %v342 = vpop.permute.xlu0 %341
    %v343 = vsel %vm175, %v340, 0
    %v345 = vsel %vm175, %v342, 0
    %347 = vmatprep.subr.mxu0 0.0
    %348 = vmatpush1.xpose.msra.mxu0 %v345
    %349 = vmatprep.subr.mxu0 0.0
    %350 = vmatpush1.xpose.msra.mxu0 0.0
    %351 = vmatprep.subr.mxu0 0.0
    %352 = vmatpush1.xpose.msra.mxu0 0.0
    %353 = vmatprep.subr.mxu0 0.0
    %354 = vmatpush1.xpose.msra.mxu0 0.0
    %355 = vmatprep.subr.mxu0 0.0
    %356 = vmatpush1.xpose.msra.mxu0 0.0
    %357 = vmatprep.subr.mxu0 0.0
    %358 = vmatpush1.xpose.msra.mxu0 0.0
    %359 = vmatprep.subr.mxu0 0.0
    %360 = vmatpush1.xpose.msra.mxu0 0.0
    %361 = vmatprep.subr.mxu0 0.0
    %362 = vmatpush1.xpose.msra.mxu0 0.0
    %363 = vmatprep.subr.mxu0 0.0
    %364 = vmatpush1.xpose.msra.mxu0 0.0
    %365 = vmatprep.subr.mxu0 0.0
    %366 = vmatpush1.xpose.msra.mxu0 0.0
    %367 = vmatprep.subr.mxu0 0.0
    %368 = vmatpush1.xpose.msra.mxu0 0.0
    %369 = vmatprep.subr.mxu0 0.0
    %370 = vmatpush1.xpose.msra.mxu0 0.0
    %371 = vmatprep.subr.mxu0 0.0
    %372 = vmatpush1.xpose.msra.mxu0 0.0
    %373 = vmatprep.subr.mxu0 0.0
    %374 = vmatpush1.xpose.msra.mxu0 0.0
    %375 = vmatprep.subr.mxu0 0.0
    %376 = vmatpush1.xpose.msra.mxu0 0.0
    %377 = vmatprep.subr.mxu0 0.0
    %378 = vmatpush1.xpose.msra.mxu0 0.0
    %379 = vmatprep.subr.mxu0 0.0
    %380 = vmatpush1.xpose.msra.mxu0 0.0
    %381 = vmatprep.subr.mxu0 0.0
    %382 = vmatpush1.xpose.msra.mxu0 0.0
    %383 = vmatprep.subr.mxu0 0.0
    %384 = vmatpush1.xpose.msra.mxu0 0.0
    %385 = vmatprep.subr.mxu0 0.0
    %386 = vmatpush1.xpose.msra.mxu0 0.0
    %387 = vmatprep.subr.mxu0 0.0
    %388 = vmatpush1.xpose.msra.mxu0 0.0
    %389 = vmatprep.subr.mxu0 0.0
    %390 = vmatpush1.xpose.msra.mxu0 0.0
    %391 = vmatprep.subr.mxu0 0.0
    %392 = vmatpush1.xpose.msra.mxu0 0.0
    %393 = vmatprep.subr.mxu0 0.0
    %394 = vmatpush1.xpose.msra.mxu0 0.0
    %395 = vmatprep.subr.mxu0 0.0
    %396 = vmatpush1.xpose.msra.mxu0 0.0
    %397 = vmatprep.subr.mxu0 0.0
    %398 = vmatpush1.xpose.msra.mxu0 0.0
    %399 = vmatprep.subr.mxu0 0.0
    %400 = vmatpush1.xpose.msra.mxu0 0.0
    %401 = vmatprep.subr.mxu0 0.0
    %402 = vmatpush1.xpose.msra.mxu0 0.0
    %403 = vmatprep.subr.mxu0 0.0
    %404 = vmatpush1.xpose.msra.mxu0 0.0
    %405 = vmatprep.subr.mxu0 0.0
    %406 = vmatpush1.xpose.msra.mxu0 0.0
    %407 = vmatprep.subr.mxu0 0.0
    %408 = vmatpush1.xpose.msra.mxu0 0.0
    %409 = vmatprep.subr.mxu0 0.0
    %410 = vmatpush1.xpose.msra.mxu0 0.0
    %411 = vmatprep.mubr.f32.mxu0 0.0
    %412 = vmatmul.mubr.f32.gmra.mrb[0].mxu0 %v343
    %v413 = vpop.f32.mrb[0].mxu0
    %v414 = vadd.f32 0.0, %v413
    %v415 = vpop.f32.mrb[0].mxu0
    %416 = vdwg.mxu0
    %v417 = vsel %vm251, %v414, -inf
    %418 = vmax.xlane.f32.xlu0 %v417
    %v419 = vpop.xlane.xlu0 %418
    %v420 = vsub.f32 %v414, %v419
    %v421 = vmul.f32 %v420, 1.442695
    %v422 = vpow.pop %v421
    %v423 = vsel %vm251, %v422, 0.0
    %424 = vadd.xlane.f32.xlu0 %v423
    %v425 = vpop.xlane.xlu0 %424
    %v426 = vrcp.pop %v425
    %v427 = vmul.f32 %v422, %v426
    %428 = vrot.lane.b32.xlu0 %v164, 48
    %v429 = vpop.permute.xlu0 %428
    %v432 = vsel %vm251, %v427, 0
    %434 = vmatprep.subr.mxu0 0.0
    %435 = vmatpush1.msra.mxu0 %v429
    %436 = vmatprep.subr.mxu0 0.0
    %437 = vmatpush1.msra.mxu0 0.0
    %438 = vmatprep.subr.mxu0 0.0
    %439 = vmatpush1.msra.mxu0 0.0
    %440 = vmatprep.subr.mxu0 0.0
    %441 = vmatpush1.msra.mxu0 0.0
    %442 = vmatprep.subr.mxu0 0.0
    %443 = vmatpush1.msra.mxu0 0.0
    %444 = vmatprep.subr.mxu0 0.0
    %445 = vmatpush1.msra.mxu0 0.0
    %446 = vmatprep.subr.mxu0 0.0
    %447 = vmatpush1.msra.mxu0 0.0
    %448 = vmatprep.subr.mxu0 0.0
    %449 = vmatpush1.msra.mxu0 0.0
    %450 = vmatprep.subr.mxu0 0.0
    %451 = vmatpush1.msra.mxu0 0.0
    %452 = vmatprep.subr.mxu0 0.0
    %453 = vmatpush1.msra.mxu0 0.0
    %454 = vmatprep.subr.mxu0 0.0
    %455 = vmatpush1.msra.mxu0 0.0
    %456 = vmatprep.subr.mxu0 0.0
    %457 = vmatpush1.msra.mxu0 0.0
    %458 = vmatprep.subr.mxu0 0.0
    %459 = vmatpush1.msra.mxu0 0.0
    %460 = vmatprep.subr.mxu0 0.0
    %461 = vmatpush1.msra.mxu0 0.0
    %462 = vmatprep.subr.mxu0 0.0
    %463 = vmatpush1.msra.mxu0 0.0
    %464 = vmatprep.subr.mxu0 0.0
    %465 = vmatpush1.msra.mxu0 0.0
    %466 = vmatprep.subr.mxu0 0.0
    %467 = vmatpush1.msra.mxu0 0.0
    %468 = vmatprep.subr.mxu0 0.0
    %469 = vmatpush1.msra.mxu0 0.0
    %470 = vmatprep.subr.mxu0 0.0
    %471 = vmatpush1.msra.mxu0 0.0
    %472 = vmatprep.subr.mxu0 0.0
    %473 = vmatpush1.msra.mxu0 0.0
    %474 = vmatprep.subr.mxu0 0.0
    %475 = vmatpush1.msra.mxu0 0.0
    %476 = vmatprep.subr.mxu0 0.0
    %477 = vmatpush1.msra.mxu0 0.0
    %478 = vmatprep.subr.mxu0 0.0
    %479 = vmatpush1.msra.mxu0 0.0
    %480 = vmatprep.subr.mxu0 0.0
    %481 = vmatpush1.msra.mxu0 0.0
    %482 = vmatprep.subr.mxu0 0.0
    %483 = vmatpush1.msra.mxu0 0.0
    %484 = vmatprep.subr.mxu0 0.0
    %485 = vmatpush1.msra.mxu0 0.0
    %486 = vmatprep.subr.mxu0 0.0
    %487 = vmatpush1.msra.mxu0 0.0
    %488 = vmatprep.subr.mxu0 0.0
    %489 = vmatpush1.msra.mxu0 0.0
    %490 = vmatprep.subr.mxu0 0.0
    %491 = vmatpush1.msra.mxu0 0.0
    %492 = vmatprep.subr.mxu0 0.0
    %493 = vmatpush1.msra.mxu0 0.0
    %494 = vmatprep.subr.mxu0 0.0
    %495 = vmatpush1.msra.mxu0 0.0
    %496 = vmatprep.subr.mxu0 0.0
    %497 = vmatpush1.msra.mxu0 0.0
    %498 = vmatprep.mubr.f32.mxu0 0.0
    %499 = vmatmul.mubr.f32.gmra.mrb[0].mxu0 %v432
    %v500 = vpop.f32.mrb[0].mxu0
    %v501 = vadd.f32 0.0, %v500
    %v502 = vpop.f32.mrb[0].mxu0
    %503 = vdwg.mxu0
    %505 = vrot.lane.b32.xlu0 %v501, 16
    %v506 = vpop.permute.xlu0 %505
    %v508 = vsel %vm175, %v336, %v506
    %510 = vrot.lane.b32.xlu0 %v169, 96
    %v511 = vpop.permute.xlu0 %510
    %v513 = vsel %vm175, %v159, 0
    %v515 = vsel %vm175, %v511, 0
    %517 = vmatprep.subr.mxu0 0.0
    %518 = vmatpush1.xpose.msra.mxu0 %v515
    %519 = vmatprep.subr.mxu0 0.0
    %520 = vmatpush1.xpose.msra.mxu0 0.0
    %521 = vmatprep.subr.mxu0 0.0
    %522 = vmatpush1.xpose.msra.mxu0 0.0
    %523 = vmatprep.subr.mxu0 0.0
    %524 = vmatpush1.xpose.msra.mxu0 0.0
    %525 = vmatprep.subr.mxu0 0.0
    %526 = vmatpush1.xpose.msra.mxu0 0.0
    %527 = vmatprep.subr.mxu0 0.0
    %528 = vmatpush1.xpose.msra.mxu0 0.0
    %529 = vmatprep.subr.mxu0 0.0
    %530 = vmatpush1.xpose.msra.mxu0 0.0
    %531 = vmatprep.subr.mxu0 0.0
    %532 = vmatpush1.xpose.msra.mxu0 0.0
    %533 = vmatprep.subr.mxu0 0.0
    %534 = vmatpush1.xpose.msra.mxu0 0.0
    %535 = vmatprep.subr.mxu0 0.0
    %536 = vmatpush1.xpose.msra.mxu0 0.0
    %537 = vmatprep.subr.mxu0 0.0
    %538 = vmatpush1.xpose.msra.mxu0 0.0
    %539 = vmatprep.subr.mxu0 0.0
    %540 = vmatpush1.xpose.msra.mxu0 0.0
    %541 = vmatprep.subr.mxu0 0.0
    %542 = vmatpush1.xpose.msra.mxu0 0.0
    %543 = vmatprep.subr.mxu0 0.0
    %544 = vmatpush1.xpose.msra.mxu0 0.0
    %545 = vmatprep.subr.mxu0 0.0
    %546 = vmatpush1.xpose.msra.mxu0 0.0
    %547 = vmatprep.subr.mxu0 0.0
    %548 = vmatpush1.xpose.msra.mxu0 0.0
    %549 = vmatprep.subr.mxu0 0.0
    %550 = vmatpush1.xpose.msra.mxu0 0.0
    %551 = vmatprep.subr.mxu0 0.0
    %552 = vmatpush1.xpose.msra.mxu0 0.0
    %553 = vmatprep.subr.mxu0 0.0
    %554 = vmatpush1.xpose.msra.mxu0 0.0
    %555 = vmatprep.subr.mxu0 0.0
    %556 = vmatpush1.xpose.msra.mxu0 0.0
    %557 = vmatprep.subr.mxu0 0.0
    %558 = vmatpush1.xpose.msra.mxu0 0.0
    %559 = vmatprep.subr.mxu0 0.0
    %560 = vmatpush1.xpose.msra.mxu0 0.0
    %561 = vmatprep.subr.mxu0 0.0
    %562 = vmatpush1.xpose.msra.mxu0 0.0
    %563 = vmatprep.subr.mxu0 0.0
    %564 = vmatpush1.xpose.msra.mxu0 0.0
    %565 = vmatprep.subr.mxu0 0.0
    %566 = vmatpush1.xpose.msra.mxu0 0.0
    %567 = vmatprep.subr.mxu0 0.0
    %568 = vmatpush1.xpose.msra.mxu0 0.0
    %569 = vmatprep.subr.mxu0 0.0
    %570 = vmatpush1.xpose.msra.mxu0 0.0
    %571 = vmatprep.subr.mxu0 0.0
    %572 = vmatpush1.xpose.msra.mxu0 0.0
    %573 = vmatprep.subr.mxu0 0.0
    %574 = vmatpush1.xpose.msra.mxu0 0.0
    %575 = vmatprep.subr.mxu0 0.0
    %576 = vmatpush1.xpose.msra.mxu0 0.0
    %577 = vmatprep.subr.mxu0 0.0
    %578 = vmatpush1.xpose.msra.mxu0 0.0
    %579 = vmatprep.subr.mxu0 0.0
    %580 = vmatpush1.xpose.msra.mxu0 0.0
    %581 = vmatprep.mubr.f32.mxu0 0.0
    %582 = vmatmul.mubr.f32.gmra.mrb[0].mxu0 %v513
    %v583 = vpop.f32.mrb[0].mxu0
    %v584 = vadd.f32 0.0, %v583
    %v585 = vpop.f32.mrb[0].mxu0
    %586 = vdwg.mxu0
    %v587 = vsel %vm251, %v584, -inf
    %588 = vmax.xlane.f32.xlu0 %v587
    %v589 = vpop.xlane.xlu0 %588
    %v590 = vsub.f32 %v584, %v589
    %v591 = vmul.f32 %v590, 1.442695
    %v592 = vpow.pop %v591
    %v593 = vsel %vm251, %v592, 0.0
    %594 = vadd.xlane.f32.xlu0 %v593
    %v595 = vpop.xlane.xlu0 %594
    %v596 = vrcp.pop %v595
    %v597 = vmul.f32 %v592, %v596
    %598 = vrot.lane.b32.xlu0 %v169, 64
    %v599 = vpop.permute.xlu0 %598
    %v602 = vsel %vm251, %v597, 0
    %604 = vmatprep.subr.mxu0 0.0
    %605 = vmatpush1.msra.mxu0 %v599
    %606 = vmatprep.subr.mxu0 0.0
    %607 = vmatpush1.msra.mxu0 0.0
    %608 = vmatprep.subr.mxu0 0.0
    %609 = vmatpush1.msra.mxu0 0.0
    %610 = vmatprep.subr.mxu0 0.0
    %611 = vmatpush1.msra.mxu0 0.0
    %612 = vmatprep.subr.mxu0 0.0
    %613 = vmatpush1.msra.mxu0 0.0
    %614 = vmatprep.subr.mxu0 0.0
    %615 = vmatpush1.msra.mxu0 0.0
    %616 = vmatprep.subr.mxu0 0.0
    %617 = vmatpush1.msra.mxu0 0.0
    %618 = vmatprep.subr.mxu0 0.0
    %619 = vmatpush1.msra.mxu0 0.0
    %620 = vmatprep.subr.mxu0 0.0
    %621 = vmatpush1.msra.mxu0 0.0
    %622 = vmatprep.subr.mxu0 0.0
    %623 = vmatpush1.msra.mxu0 0.0
    %624 = vmatprep.subr.mxu0 0.0
    %625 = vmatpush1.msra.mxu0 0.0
    %626 = vmatprep.subr.mxu0 0.0
    %627 = vmatpush1.msra.mxu0 0.0
    %628 = vmatprep.subr.mxu0 0.0
    %629 = vmatpush1.msra.mxu0 0.0
    %630 = vmatprep.subr.mxu0 0.0
    %631 = vmatpush1.msra.mxu0 0.0
    %632 = vmatprep.subr.mxu0 0.0
    %633 = vmatpush1.msra.mxu0 0.0
    %634 = vmatprep.subr.mxu0 0.0
    %635 = vmatpush1.msra.mxu0 0.0
    %636 = vmatprep.subr.mxu0 0.0
    %637 = vmatpush1.msra.mxu0 0.0
    %638 = vmatprep.subr.mxu0 0.0
    %639 = vmatpush1.msra.mxu0 0.0
    %640 = vmatprep.subr.mxu0 0.0
    %641 = vmatpush1.msra.mxu0 0.0
    %642 = vmatprep.subr.mxu0 0.0
    %643 = vmatpush1.msra.mxu0 0.0
    %644 = vmatprep.subr.mxu0 0.0
    %645 = vmatpush1.msra.mxu0 0.0
    %646 = vmatprep.subr.mxu0 0.0
    %647 = vmatpush1.msra.mxu0 0.0
    %648 = vmatprep.subr.mxu0 0.0
    %649 = vmatpush1.msra.mxu0 0.0
    %650 = vmatprep.subr.mxu0 0.0
    %651 = vmatpush1.msra.mxu0 0.0
    %652 = vmatprep.subr.mxu0 0.0
    %653 = vmatpush1.msra.mxu0 0.0
    %654 = vmatprep.subr.mxu0 0.0
    %655 = vmatpush1.msra.mxu0 0.0
    %656 = vmatprep.subr.mxu0 0.0
    %657 = vmatpush1.msra.mxu0 0.0
    %658 = vmatprep.subr.mxu0 0.0
    %659 = vmatpush1.msra.mxu0 0.0
    %660 = vmatprep.subr.mxu0 0.0
    %661 = vmatpush1.msra.mxu0 0.0
    %662 = vmatprep.subr.mxu0 0.0
    %663 = vmatpush1.msra.mxu0 0.0
    %664 = vmatprep.subr.mxu0 0.0
    %665 = vmatpush1.msra.mxu0 0.0
    %666 = vmatprep.subr.mxu0 0.0
    %667 = vmatpush1.msra.mxu0 0.0
    %668 = vmatprep.mubr.f32.mxu0 0.0
    %669 = vmatmul.mubr.f32.gmra.mrb[0].mxu0 %v602
    %v670 = vpop.f32.mrb[0].mxu0
    %v671 = vadd.f32 0.0, %v670
    %v672 = vpop.f32.mrb[0].mxu0
    %673 = vdwg.mxu0
    %674 = vrot.lane.b32.xlu0 %v159, 112
    %v675 = vpop.permute.xlu0 %674
    %676 = vrot.lane.b32.xlu0 %v169, 80
    %v677 = vpop.permute.xlu0 %676
    %v678 = vsel %vm175, %v675, 0
    %v680 = vsel %vm175, %v677, 0
    %682 = vmatprep.subr.mxu0 0.0
    %683 = vmatpush1.xpose.msra.mxu0 %v680
    %684 = vmatprep.subr.mxu0 0.0
    %685 = vmatpush1.xpose.msra.mxu0 0.0
    %686 = vmatprep.subr.mxu0 0.0
    %687 = vmatpush1.xpose.msra.mxu0 0.0
    %688 = vmatprep.subr.mxu0 0.0
    %689 = vmatpush1.xpose.msra.mxu0 0.0
    %690 = vmatprep.subr.mxu0 0.0
    %691 = vmatpush1.xpose.msra.mxu0 0.0
    %692 = vmatprep.subr.mxu0 0.0
    %693 = vmatpush1.xpose.msra.mxu0 0.0
    %694 = vmatprep.subr.mxu0 0.0
    %695 = vmatpush1.xpose.msra.mxu0 0.0
    %696 = vmatprep.subr.mxu0 0.0
    %697 = vmatpush1.xpose.msra.mxu0 0.0
    %698 = vmatprep.subr.mxu0 0.0
    %699 = vmatpush1.xpose.msra.mxu0 0.0
    %700 = vmatprep.subr.mxu0 0.0
    %701 = vmatpush1.xpose.msra.mxu0 0.0
    %702 = vmatprep.subr.mxu0 0.0
    %703 = vmatpush1.xpose.msra.mxu0 0.0
    %704 = vmatprep.subr.mxu0 0.0
    %705 = vmatpush1.xpose.msra.mxu0 0.0
    %706 = vmatprep.subr.mxu0 0.0
    %707 = vmatpush1.xpose.msra.mxu0 0.0
    %708 = vmatprep.subr.mxu0 0.0
    %709 = vmatpush1.xpose.msra.mxu0 0.0
    %710 = vmatprep.subr.mxu0 0.0
    %711 = vmatpush1.xpose.msra.mxu0 0.0
    %712 = vmatprep.subr.mxu0 0.0
    %713 = vmatpush1.xpose.msra.mxu0 0.0
    %714 = vmatprep.subr.mxu0 0.0
    %715 = vmatpush1.xpose.msra.mxu0 0.0
    %716 = vmatprep.subr.mxu0 0.0
    %717 = vmatpush1.xpose.msra.mxu0 0.0
    %718 = vmatprep.subr.mxu0 0.0
    %719 = vmatpush1.xpose.msra.mxu0 0.0
    %720 = vmatprep.subr.mxu0 0.0
    %721 = vmatpush1.xpose.msra.mxu0 0.0
    %722 = vmatprep.subr.mxu0 0.0
    %723 = vmatpush1.xpose.msra.mxu0 0.0
    %724 = vmatprep.subr.mxu0 0.0
    %725 = vmatpush1.xpose.msra.mxu0 0.0
    %726 = vmatprep.subr.mxu0 0.0
    %727 = vmatpush1.xpose.msra.mxu0 0.0
    %728 = vmatprep.subr.mxu0 0.0
    %729 = vmatpush1.xpose.msra.mxu0 0.0
    %730 = vmatprep.subr.mxu0 0.0
    %731 = vmatpush1.xpose.msra.mxu0 0.0
    %732 = vmatprep.subr.mxu0 0.0
    %733 = vmatpush1.xpose.msra.mxu0 0.0
    %734 = vmatprep.subr.mxu0 0.0
    %735 = vmatpush1.xpose.msra.mxu0 0.0
    %736 = vmatprep.subr.mxu0 0.0
    %737 = vmatpush1.xpose.msra.mxu0 0.0
    %738 = vmatprep.subr.mxu0 0.0
    %739 = vmatpush1.xpose.msra.mxu0 0.0
    %740 = vmatprep.subr.mxu0 0.0
    %741 = vmatpush1.xpose.msra.mxu0 0.0
    %742 = vmatprep.subr.mxu0 0.0
    %743 = vmatpush1.xpose.msra.mxu0 0.0
    %744 = vmatprep.subr.mxu0 0.0
    %745 = vmatpush1.xpose.msra.mxu0 0.0
    %746 = vmatprep.mubr.f32.mxu0 0.0
    %747 = vmatmul.mubr.f32.gmra.mrb[0].mxu0 %v678
    %v748 = vpop.f32.mrb[0].mxu0
    %v749 = vadd.f32 0.0, %v748
    %v750 = vpop.f32.mrb[0].mxu0
    %751 = vdwg.mxu0
    %v752 = vsel %vm251, %v749, -inf
    %753 = vmax.xlane.f32.xlu0 %v752
    %v754 = vpop.xlane.xlu0 %753
    %v755 = vsub.f32 %v749, %v754
    %v756 = vmul.f32 %v755, 1.442695
    %v757 = vpow.pop %v756
    %v758 = vsel %vm251, %v757, 0.0
    %759 = vadd.xlane.f32.xlu0 %v758
    %v760 = vpop.xlane.xlu0 %759
    %v761 = vrcp.pop %v760
    %v762 = vmul.f32 %v757, %v761
    %763 = vrot.lane.b32.xlu0 %v169, 48
    %v764 = vpop.permute.xlu0 %763
    %v767 = vsel %vm251, %v762, 0
    %769 = vmatprep.subr.mxu0 0.0
    %770 = vmatpush1.msra.mxu0 %v764
    %771 = vmatprep.subr.mxu0 0.0
    %772 = vmatpush1.msra.mxu0 0.0
    %773 = vmatprep.subr.mxu0 0.0
    %774 = vmatpush1.msra.mxu0 0.0
    %775 = vmatprep.subr.mxu0 0.0
    %776 = vmatpush1.msra.mxu0 0.0
    %777 = vmatprep.subr.mxu0 0.0
    %778 = vmatpush1.msra.mxu0 0.0
    %779 = vmatprep.subr.mxu0 0.0
    %780 = vmatpush1.msra.mxu0 0.0
    %781 = vmatprep.subr.mxu0 0.0
    %782 = vmatpush1.msra.mxu0 0.0
    %783 = vmatprep.subr.mxu0 0.0
    %784 = vmatpush1.msra.mxu0 0.0
    %785 = vmatprep.subr.mxu0 0.0
    %786 = vmatpush1.msra.mxu0 0.0
    %787 = vmatprep.subr.mxu0 0.0
    %788 = vmatpush1.msra.mxu0 0.0
    %789 = vmatprep.subr.mxu0 0.0
    %790 = vmatpush1.msra.mxu0 0.0
    %791 = vmatprep.subr.mxu0 0.0
    %792 = vmatpush1.msra.mxu0 0.0
    %793 = vmatprep.subr.mxu0 0.0
    %794 = vmatpush1.msra.mxu0 0.0
    %795 = vmatprep.subr.mxu0 0.0
    %796 = vmatpush1.msra.mxu0 0.0
    %797 = vmatprep.subr.mxu0 0.0
    %798 = vmatpush1.msra.mxu0 0.0
    %799 = vmatprep.subr.mxu0 0.0
    %800 = vmatpush1.msra.mxu0 0.0
    %801 = vmatprep.subr.mxu0 0.0
    %802 = vmatpush1.msra.mxu0 0.0
    %803 = vmatprep.subr.mxu0 0.0
    %804 = vmatpush1.msra.mxu0 0.0
    %805 = vmatprep.subr.mxu0 0.0
    %806 = vmatpush1.msra.mxu0 0.0
    %807 = vmatprep.subr.mxu0 0.0
    %808 = vmatpush1.msra.mxu0 0.0
    %809 = vmatprep.subr.mxu0 0.0
    %810 = vmatpush1.msra.mxu0 0.0
    %811 = vmatprep.subr.mxu0 0.0
    %812 = vmatpush1.msra.mxu0 0.0
    %813 = vmatprep.subr.mxu0 0.0
    %814 = vmatpush1.msra.mxu0 0.0
    %815 = vmatprep.subr.mxu0 0.0
    %816 = vmatpush1.msra.mxu0 0.0
    %817 = vmatprep.subr.mxu0 0.0
    %818 = vmatpush1.msra.mxu0 0.0
    %819 = vmatprep.subr.mxu0 0.0
    %820 = vmatpush1.msra.mxu0 0.0
    %821 = vmatprep.subr.mxu0 0.0
    %822 = vmatpush1.msra.mxu0 0.0
    %823 = vmatprep.subr.mxu0 0.0
    %824 = vmatpush1.msra.mxu0 0.0
    %825 = vmatprep.subr.mxu0 0.0
    %826 = vmatpush1.msra.mxu0 0.0
    %827 = vmatprep.subr.mxu0 0.0
    %828 = vmatpush1.msra.mxu0 0.0
    %829 = vmatprep.subr.mxu0 0.0
    %830 = vmatpush1.msra.mxu0 0.0
    %831 = vmatprep.subr.mxu0 0.0
    %832 = vmatpush1.msra.mxu0 0.0
    %833 = vmatprep.mubr.f32.mxu0 0.0
    %834 = vmatmul.mubr.f32.gmra.mrb[0].mxu0 %v767
    %v835 = vpop.f32.mrb[0].mxu0
    %v836 = vadd.f32 0.0, %v835
    %v837 = vpop.f32.mrb[0].mxu0
    %838 = vdwg.mxu0
    %840 = vrot.lane.b32.xlu0 %v836, 16
    %v841 = vpop.permute.xlu0 %840
    %v843 = vsel %vm175, %v671, %v841
    %v844 = vld [vmem:[%s3] sm:$0xff]
    %v845 = vld [vmem:[%s3 + $0x8] sm:$0xff]
    %v846 = vld [vmem:[%s3 + $0x10] sm:$0xff]
    %v847 = vld [vmem:[%s3 + $0x18] sm:$0xff]
    %v848 = vld [vmem:[%s4] sm:$0x1]
    %v850 = vlaneseq
    %v851 = vshrl.u32 %v850, 7
    %v852 = vsub.s32 0, %v851
    %v853 = vrot.slane %v848, %v852
    %v856 = vsel %vm74, %v508, 0
    %v859 = vsel %vm74, %v843, 0
    %861 = vmatprep.subr.mxu0 0.0
    %862 = vmatpush1.msra.mxu0 %v844
    %863 = vmatprep.subr.mxu0 0.0
    %864 = vmatpush1.msra.mxu0 %v845
    %865 = vmatprep.subr.mxu0 0.0
    %866 = vmatpush1.msra.mxu0 %v846
    %867 = vmatprep.subr.mxu0 0.0
    %868 = vmatpush1.msra.mxu0 %v847
    %869 = vmatprep.subr.mxu0 0.0
    %870 = vmatpush1.msra.mxu0 0.0
    %871 = vmatprep.subr.mxu0 0.0
    %872 = vmatpush1.msra.mxu0 0.0
    %873 = vmatprep.subr.mxu0 0.0
    %874 = vmatpush1.msra.mxu0 0.0
    %875 = vmatprep.subr.mxu0 0.0
    %876 = vmatpush1.msra.mxu0 0.0
    %877 = vmatprep.subr.mxu0 0.0
    %878 = vmatpush1.msra.mxu0 0.0
    %879 = vmatprep.subr.mxu0 0.0
    %880 = vmatpush1.msra.mxu0 0.0
    %881 = vmatprep.subr.mxu0 0.0
    %882 = vmatpush1.msra.mxu0 0.0
    %883 = vmatprep.subr.mxu0 0.0
    %884 = vmatpush1.msra.mxu0 0.0
    %885 = vmatprep.subr.mxu0 0.0
    %886 = vmatpush1.msra.mxu0 0.0
    %887 = vmatprep.subr.mxu0 0.0
    %888 = vmatpush1.msra.mxu0 0.0
    %889 = vmatprep.subr.mxu0 0.0
    %890 = vmatpush1.msra.mxu0 0.0
    %891 = vmatprep.subr.mxu0 0.0
    %892 = vmatpush1.msra.mxu0 0.0
    %893 = vmatprep.subr.mxu0 0.0
    %894 = vmatpush1.msra.mxu0 0.0
    %895 = vmatprep.subr.mxu0 0.0
    %896 = vmatpush1.msra.mxu0 0.0
    %897 = vmatprep.subr.mxu0 0.0
    %898 = vmatpush1.msra.mxu0 0.0
    %899 = vmatprep.subr.mxu0 0.0
    %900 = vmatpush1.msra.mxu0 0.0
    %901 = vmatprep.subr.mxu0 0.0
    %902 = vmatpush1.msra.mxu0 0.0
    %903 = vmatprep.subr.mxu0 0.0
    %904 = vmatpush1.msra.mxu0 0.0
    %905 = vmatprep.subr.mxu0 0.0
    %906 = vmatpush1.msra.mxu0 0.0
    %907 = vmatprep.subr.mxu0 0.0
    %908 = vmatpush1.msra.mxu0 0.0
    %909 = vmatprep.subr.mxu0 0.0
    %910 = vmatpush1.msra.mxu0 0.0
    %911 = vmatprep.subr.mxu0 0.0
    %912 = vmatpush1.msra.mxu0 0.0
    %913 = vmatprep.subr.mxu0 0.0
    %914 = vmatpush1.msra.mxu0 0.0
    %915 = vmatprep.subr.mxu0 0.0
    %916 = vmatpush1.msra.mxu0 0.0
    %917 = vmatprep.subr.mxu0 0.0
    %918 = vmatpush1.msra.mxu0 0.0
    %919 = vmatprep.subr.mxu0 0.0
    %920 = vmatpush1.msra.mxu0 0.0
    %921 = vmatprep.subr.mxu0 0.0
    %922 = vmatpush1.msra.mxu0 0.0
    %923 = vmatprep.subr.mxu0 0.0
    %924 = vmatpush1.msra.mxu0 0.0
    %925 = vmatprep.mubr.f32.mxu0 0.0
    %926 = vmatmul.mubr.f32.gmra.mrb[0].mxu0 %v856
    %v927 = vpop.f32.mrb[0].mxu0
    %v928 = vadd.f32 %v853, %v927
    %v929 = vpop.f32.mrb[0].mxu0
    %930 = vmatprep.mubr.f32.mxu0 0.0
    %931 = vmatmul.mubr.f32.gmra.mrb[0].mxu0 %v859
    %v932 = vpop.f32.mrb[0].mxu0
    %v933 = vadd.f32 %v853, %v932
    %v934 = vpop.f32.mrb[0].mxu0
    %935 = vdwg.mxu0
    %v936 = vadd.f32 %v59, %v928
    %v937 = vadd.f32 %v60, %v933
    %v938 = vsel %vm74, %v936, 0.0
    %939 = vadd.xlane.f32.xlu0 %v938
    %v940 = vpop.xlane.xlu0 %939
    %v941 = vsel %vm74, %v937, 0.0
    %942 = vadd.xlane.f32.xlu0 %v941
    %v943 = vpop.xlane.xlu0 %942
    %v944 = vrcp.pop 32.0
    %v945 = vmul.f32 %v940, %v944
    %v946 = vmul.f32 %v943, %v944
    %v947 = vsub.f32 %v936, %v945
    %v948 = vsub.f32 %v937, %v946
    %v949 = vmul.f32 %v947, %v947
    %v950 = vmul.f32 %v948, %v948
    %v951 = vsel %vm74, %v949, 0.0
    %952 = vadd.xlane.f32.xlu0 %v951
    %v953 = vpop.xlane.xlu0 %952
    %v954 = vsel %vm74, %v950, 0.0
    %955 = vadd.xlane.f32.xlu0 %v954
    %v956 = vpop.xlane.xlu0 %955
    %v957 = vmul.f32 %v953, %v944
    %v958 = vmul.f32 %v956, %v944
    %v959 = vadd.f32 %v957, 1e-05
    %v960 = vadd.f32 %v958, 1e-05
    %v961 = vrsqrt.pop %v959
    %v962 = vrsqrt.pop %v960
    %v963 = vmul.f32 %v947, %v961
    %v964 = vmul.f32 %v948, %v962
    %v965 = vld [vmem:[%s9] sm:$0x1]
    %v967 = vlaneseq
    %v968 = vshrl.u32 %v967, 7
    %v969 = vsub.s32 0, %v968
    %v970 = vrot.slane %v965, %v969
    %v972 = vmul.f32 %v963, %v970
    %v973 = vmul.f32 %v964, %v970
    %v974 = vld [vmem:[%s10] sm:$0x1]
    %v976 = vlaneseq
    %v977 = vshrl.u32 %v976, 7
    %v978 = vsub.s32 0, %v977
    %v979 = vrot.slane %v974, %v978
    %v981 = vadd.f32 %v972, %v979
    %v982 = vadd.f32 %v973, %v979
    %v983 = vld [vmem:[#allocation2] sm:$0xff]
    %v984 = vld [vmem:[#allocation2 + $0x8] sm:$0xff]
    %v985 = vld [vmem:[#allocation2 + $0x10] sm:$0xff]
    %v986 = vld [vmem:[#allocation2 + $0x18] sm:$0xff]
    %v987 = vld [vmem:[%s6] sm:$0x1]
    %v989 = vlaneseq
    %v990 = vshrl.u32 %v989, 7
    %v991 = vsub.s32 0, %v990
    %v992 = vrot.slane %v987, %v991
    %v995 = vsel %vm74, %v981, 0
    %v998 = vsel %vm74, %v982, 0
    %1000 = vmatprep.subr.mxu0 0.0
    %1001 = vmatpush1.msra.mxu0 %v983
    %1002 = vmatprep.subr.mxu0 0.0
    %1003 = vmatpush1.msra.mxu0 %v984
    %1004 = vmatprep.subr.mxu0 0.0
    %1005 = vmatpush1.msra.mxu0 %v985
    %1006 = vmatprep.subr.mxu0 0.0
    %1007 = vmatpush1.msra.mxu0 %v986
    %1008 = vmatprep.subr.mxu0 0.0
    %1009 = vmatpush1.msra.mxu0 0.0
    %1010 = vmatprep.subr.mxu0 0.0
    %1011 = vmatpush1.msra.mxu0 0.0
    %1012 = vmatprep.subr.mxu0 0.0
    %1013 = vmatpush1.msra.mxu0 0.0
    %1014 = vmatprep.subr.mxu0 0.0
    %1015 = vmatpush1.msra.mxu0 0.0
    %1016 = vmatprep.subr.mxu0 0.0
    %1017 = vmatpush1.msra.mxu0 0.0
    %1018 = vmatprep.subr.mxu0 0.0
    %1019 = vmatpush1.msra.mxu0 0.0
    %1020 = vmatprep.subr.mxu0 0.0
    %1021 = vmatpush1.msra.mxu0 0.0
    %1022 = vmatprep.subr.mxu0 0.0
    %1023 = vmatpush1.msra.mxu0 0.0
    %1024 = vmatprep.subr.mxu0 0.0
    %1025 = vmatpush1.msra.mxu0 0.0
    %1026 = vmatprep.subr.mxu0 0.0
    %1027 = vmatpush1.msra.mxu0 0.0
    %1028 = vmatprep.subr.mxu0 0.0
    %1029 = vmatpush1.msra.mxu0 0.0
    %1030 = vmatprep.subr.mxu0 0.0
    %1031 = vmatpush1.msra.mxu0 0.0
    %1032 = vmatprep.subr.mxu0 0.0
    %1033 = vmatpush1.msra.mxu0 0.0
    %1034 = vmatprep.subr.mxu0 0.0
    %1035 = vmatpush1.msra.mxu0 0.0
    %1036 = vmatprep.subr.mxu0 0.0
    %1037 = vmatpush1.msra.mxu0 0.0
    %1038 = vmatprep.subr.mxu0 0.0
    %1039 = vmatpush1.msra.mxu0 0.0
    %1040 = vmatprep.subr.mxu0 0.0
    %1041 = vmatpush1.msra.mxu0 0.0
    %1042 = vmatprep.subr.mxu0 0.0
    %1043 = vmatpush1.msra.mxu0 0.0
    %1044 = vmatprep.subr.mxu0 0.0
    %1045 = vmatpush1.msra.mxu0 0.0
    %1046 = vmatprep.subr.mxu0 0.0
    %1047 = vmatpush1.msra.mxu0 0.0
    %1048 = vmatprep.subr.mxu0 0.0
    %1049 = vmatpush1.msra.mxu0 0.0
    %1050 = vmatprep.subr.mxu0 0.0
    %1051 = vmatpush1.msra.mxu0 0.0
    %1052 = vmatprep.subr.mxu0 0.0
    %1053 = vmatpush1.msra.mxu0 0.0
    %1054 = vmatprep.subr.mxu0 0.0
    %1055 = vmatpush1.msra.mxu0 0.0
    %1056 = vmatprep.subr.mxu0 0.0
    %1057 = vmatpush1.msra.mxu0 0.0
    %1058 = vmatprep.subr.mxu0 0.0
    %1059 = vmatpush1.msra.mxu0 0.0
    %1060 = vmatprep.subr.mxu0 0.0
    %1061 = vmatpush1.msra.mxu0 0.0
    %1062 = vmatprep.subr.mxu0 0.0
    %1063 = vmatpush1.msra.mxu0 0.0
    %1064 = vmatprep.mubr.f32.mxu0 0.0
    %1065 = vmatmul.mubr.f32.gmra.mrb[0].mxu0 %v995
    %v1066 = vpop.f32.mrb[0].mxu0
    %v1067 = vadd.f32 %v992, %v1066
    %v1068 = vpop.f32.mrb[0].mxu0
    %1069 = vmatprep.mubr.f32.mxu0 0.0
    %1070 = vmatmul.mubr.f32.gmra.mrb[0].mxu0 %v998
    %v1071 = vpop.f32.mrb[0].mxu0
    %v1072 = vadd.f32 %v992, %v1071
    %v1073 = vpop.f32.mrb[0].mxu0
    %1074 = vdwg.mxu0
    %v1075 = vmax.f32 %v1067, 0.0
    %v1076 = vmax.f32 %v1072, 0.0
    %v1077 = vld [vmem:[%s7] sm:$0xff]
    %v1078 = vld [vmem:[%s7 + $0x8] sm:$0xff]
    %v1079 = vld [vmem:[%s7 + $0x10] sm:$0xff]
    %v1080 = vld [vmem:[%s7 + $0x18] sm:$0xff]
    %v1081 = vld [vmem:[%s7 + $0x20] sm:$0xff]
    %v1082 = vld [vmem:[%s7 + $0x28] sm:$0xff]
    %v1083 = vld [vmem:[%s7 + $0x30] sm:$0xff]
    %v1084 = vld [vmem:[%s7 + $0x38] sm:$0xff]
    %v1085 = vld [vmem:[%s8] sm:$0x1]
    %v1087 = vlaneseq
    %v1088 = vshrl.u32 %v1087, 7
    %v1089 = vsub.s32 0, %v1088
    %v1090 = vrot.slane %v1085, %v1089
    %vm1092 = vcmask 523264
    %v1094 = vsel %vm1092, %v1075, 0
    %v1097 = vsel %vm1092, %v1076, 0
    %1099 = vmatprep.subr.mxu0 0.0
    %1100 = vmatpush1.msra.mxu0 %v1077
    %1101 = vmatprep.subr.mxu0 0.0
    %1102 = vmatpush1.msra.mxu0 %v1078
    %1103 = vmatprep.subr.mxu0 0.0
    %1104 = vmatpush1.msra.mxu0 %v1079
    %1105 = vmatprep.subr.mxu0 0.0
    %1106 = vmatpush1.msra.mxu0 %v1080
    %1107 = vmatprep.subr.mxu0 0.0
    %1108 = vmatpush1.msra.mxu0 %v1081
    %1109 = vmatprep.subr.mxu0 0.0
    %1110 = vmatpush1.msra.mxu0 %v1082
    %1111 = vmatprep.subr.mxu0 0.0
    %1112 = vmatpush1.msra.mxu0 %v1083
    %1113 = vmatprep.subr.mxu0 0.0
    %1114 = vmatpush1.msra.mxu0 %v1084
    %1115 = vmatprep.subr.mxu0 0.0
    %1116 = vmatpush1.msra.mxu0 0.0
    %1117 = vmatprep.subr.mxu0 0.0
    %1118 = vmatpush1.msra.mxu0 0.0
    %1119 = vmatprep.subr.mxu0 0.0
    %1120 = vmatpush1.msra.mxu0 0.0
    %1121 = vmatprep.subr.mxu0 0.0
    %1122 = vmatpush1.msra.mxu0 0.0
    %1123 = vmatprep.subr.mxu0 0.0
    %1124 = vmatpush1.msra.mxu0 0.0
    %1125 = vmatprep.subr.mxu0 0.0
    %1126 = vmatpush1.msra.mxu0 0.0
    %1127 = vmatprep.subr.mxu0 0.0
    %1128 = vmatpush1.msra.mxu0 0.0
    %1129 = vmatprep.subr.mxu0 0.0
    %1130 = vmatpush1.msra.mxu0 0.0
    %1131 = vmatprep.subr.mxu0 0.0
    %1132 = vmatpush1.msra.mxu0 0.0
    %1133 = vmatprep.subr.mxu0 0.0
    %1134 = vmatpush1.msra.mxu0 0.0
    %1135 = vmatprep.subr.mxu0 0.0
    %1136 = vmatpush1.msra.mxu0 0.0
    %1137 = vmatprep.subr.mxu0 0.0
    %1138 = vmatpush1.msra.mxu0 0.0
    %1139 = vmatprep.subr.mxu0 0.0
    %1140 = vmatpush1.msra.mxu0 0.0
    %1141 = vmatprep.subr.mxu0 0.0
    %1142 = vmatpush1.msra.mxu0 0.0
    %1143 = vmatprep.subr.mxu0 0.0
    %1144 = vmatpush1.msra.mxu0 0.0
    %1145 = vmatprep.subr.mxu0 0.0
    %1146 = vmatpush1.msra.mxu0 0.0
    %1147 = vmatprep.subr.mxu0 0.0
    %1148 = vmatpush1.msra.mxu0 0.0
    %1149 = vmatprep.subr.mxu0 0.0
    %1150 = vmatpush1.msra.mxu0 0.0
    %1151 = vmatprep.subr.mxu0 0.0
    %1152 = vmatpush1.msra.mxu0 0.0
    %1153 = vmatprep.subr.mxu0 0.0
    %1154 = vmatpush1.msra.mxu0 0.0
    %1155 = vmatprep.subr.mxu0 0.0
    %1156 = vmatpush1.msra.mxu0 0.0
    %1157 = vmatprep.subr.mxu0 0.0
    %1158 = vmatpush1.msra.mxu0 0.0
    %1159 = vmatprep.subr.mxu0 0.0
    %1160 = vmatpush1.msra.mxu0 0.0
    %1161 = vmatprep.subr.mxu0 0.0
    %1162 = vmatpush1.msra.mxu0 0.0
    %1163 = vmatprep.mubr.f32.mxu0 0.0
    %1164 = vmatmul.mubr.f32.gmra.mrb[0].mxu0 %v1094
    %v1165 = vpop.f32.mrb[0].mxu0
    %v1166 = vadd.f32 %v1090, %v1165
    %v1167 = vpop.f32.mrb[0].mxu0
    %1168 = vmatprep.mubr.f32.mxu0 0.0
    %1169 = vmatmul.mubr.f32.gmra.mrb[0].mxu0 %v1097
    %v1170 = vpop.f32.mrb[0].mxu0
    %v1171 = vadd.f32 %v1090, %v1170
    %v1172 = vpop.f32.mrb[0].mxu0
    %1173 = vdwg.mxu0
    %v1174 = vadd.f32 %v981, %v1166
    %v1175 = vadd.f32 %v982, %v1171
    %v1176 = vsel %vm74, %v1174, 0.0
    %1177 = vadd.xlane.f32.xlu0 %v1176
    %v1178 = vpop.xlane.xlu0 %1177
    %v1179 = vsel %vm74, %v1175, 0.0
    %1180 = vadd.xlane.f32.xlu0 %v1179
    %v1181 = vpop.xlane.xlu0 %1180
    %v1182 = vmul.f32 %v1178, %v944
    %v1183 = vmul.f32 %v1181, %v944
    %v1184 = vsub.f32 %v1174, %v1182
    %v1185 = vsub.f32 %v1175, %v1183
    %v1186 = vmul.f32 %v1184, %v1184
    %v1187 = vmul.f32 %v1185, %v1185
    %v1188 = vsel %vm74, %v1186, 0.0
    %1189 = vadd.xlane.f32.xlu0 %v1188
    %v1190 = vpop.xlane.xlu0 %1189
    %v1191 = vsel %vm74, %v1187, 0.0
    %1192 = vadd.xlane.f32.xlu0 %v1191
    %v1193 = vpop.xlane.xlu0 %1192
    %v1194 = vmul.f32 %v1190, %v944
    %v1195 = vmul.f32 %v1193, %v944
    %v1196 = vadd.f32 %v1194, 1e-05
    %v1197 = vadd.f32 %v1195, 1e-05
    %v1198 = vrsqrt.pop %v1196
    %v1199 = vrsqrt.pop %v1197
    %v1200 = vmul.f32 %v1184, %v1198
    %v1201 = vmul.f32 %v1185, %v1199
    %v1202 = vld [vmem:[%s11] sm:$0x1]
    %v1204 = vlaneseq
    %v1205 = vshrl.u32 %v1204, 7
    %v1206 = vsub.s32 0, %v1205
    %v1207 = vrot.slane %v1202, %v1206
    %v1209 = vmul.f32 %v1200, %v1207
    %v1210 = vmul.f32 %v1201, %v1207
    %v1211 = vld [vmem:[%s12] sm:$0x1]
    %v1213 = vlaneseq
    %v1214 = vshrl.u32 %v1213, 7
    %v1215 = vsub.s32 0, %v1214
    %v1216 = vrot.slane %v1211, %v1215
    %v1218 = vadd.f32 %v1209, %v1216
    %v1219 = vadd.f32 %v1210, %v1216
    %1220 = vst.msk [vmem:[#allocation5] sm:$0xff] %vm74, %v1218
    %1221 = vst.msk [vmem:[#allocation5 + $0x8] sm:$0xff] %vm74, %v1219
    // Predicated region
    $region58: #{tpu_custom_call.1} parent=1 // pred_check
      _
    $region59: #{tpu_custom_call.1} parent=1 // pred_check_branch
      %1223 = sbr.rel (0) target = $region61
    $region60: #{tpu_custom_call.1} parent=1 // pred_region
      %s1225 = ssub.s32 256, 256
      %1226 = vsyncadd [#allocation4], %s1225
      %s1227 = sshll.u32 [#allocation5], 4
      %s1228 = int_to_ptr.vmem [resolvable:$true] %s1227
      %1233 = dma.vmem_to_hbm [thread:$0]  %s1228, 256, %s13, [#allocation4], 128, 128, 8
    $region61: #{tpu_custom_call.1} parent=1 // pred_fallthru
      _
    // Predicated region
    $region62: #{tpu_custom_call.1} parent=1 // pred_check
      _
    $region63: #{tpu_custom_call.1} parent=1 // pred_check_branch
      %1235 = sbr.rel (0) target = $region65
    $region64: #{tpu_custom_call.1} parent=1 // pred_region
      %1236 = dma.done [#allocation4], 256
    $region65: #{tpu_custom_call.1} parent=1 // pred_fallthru
      _
    %1237 = vsyncpa [#allocation3], 1
    %1238 = vsyncpa [#allocation4], 1

</llo_original>
